<compile_context>
chip_gen: v5e
topology: v5e:2x2
jax: 0.10.0
libtpu: 0.0.40
codegen_flags: <defaults>
</compile_context>

<pallas_src>
import functools
import numpy as np

import jax
import jax.numpy as jnp
from jax.experimental import pallas as pl
from jax.experimental.pallas import tpu as pltpu

# ----------------------------- configuration -------------------------------
CORR_ARGS = dict(patch_size=3, kernel_size=1, stride=1, padding=0, dilation_patch=1)
CONV_CHANNELS = 32
N_BOX_CHANNELS = 4
ROI_OUTPUT_SIZE = 3
AVG_BOX_FEATURES = True
HIDDEN_SIZE = 32
INPUT_LENGTH = 8          # L
N_LAYERS = 1
CORRELATION_ONLY = False
USE_ENV_FEATURES = False
CORRELATION_LAST_ONLY = False
SUM_LSTM_LAYERS = True
OUTPUT_SIZE = 6
F_DIM = 6
LOCATIONS_PER_BOX = 1 if AVG_BOX_FEATURES else ROI_OUTPUT_SIZE ** 2
INPUT_SIZE = F_DIM + N_BOX_CHANNELS * LOCATIONS_PER_BOX * (2 if USE_ENV_FEATURES else 1)
REDIR_CH = 0 if CORRELATION_ONLY else 32
BACKBONE_CH = 256
NEG_SLOPE = 0.1
VMEM_LIMIT = 32 * 1024 * 1024      # safe on v5e/v6e/v7x; blocks here are tiny anyway
NB_BACKBONE_FRAMES = 4             # frames per grid step in the backbone stand-in
NB_CORR_FRAMES = 2                 # frames per grid step in the fused corr/conv kernel


def _leaky(x, neg_slope=NEG_SLOPE):
    return jnp.where(x >= 0, x, neg_slope * x)


def _pick_block_frames(count, nb_max):
    """Frames per grid step: as big as allowed but keep >= 2 grid blocks (v7x has 2 TCs)."""
    if count <= 1:
        return 1
    return max(1, min(nb_max, count // 2))


def _zero_halo(buf, pad):
    """Zero only the halo ring of a (Nb, Hp, Wp, C) padded VMEM scratch buffer."""
    if pad == 0:
        return
    nb, hp, wp, c = buf.shape
    zrow = jnp.zeros((nb, pad, wp, c), buf.dtype)
    buf[:, 0:pad, :, :] = zrow
    buf[:, hp - pad:hp, :, :] = zrow
    zcol = jnp.zeros((nb, hp - 2 * pad, pad, c), buf.dtype)
    buf[:, pad:hp - pad, 0:pad, :] = zcol
    buf[:, pad:hp - pad, wp - pad:wp, :] = zcol


# ------------------------ backbone stand-in kernel --------------------------
def _backbone_s2_kernel(ph_ref, w_ref, b_ref, o_ref, *, Nb, Ho, Wo, Cin):
    """Stride-2 3x3 conv (pad=1) + LeakyReLU as ONE im2col bf16 matmul over Nb frames.

    ph_ref: (Nb, Hh, Wh, 4*Cin) space-to-depth phases of the zero-padded input,
            ph[n, I, J, (a*2+b)*Cin + c] == x_pad[n, 2I + a, 2J + b, c],
    so every tap of the strided conv is a contiguous window (stride-2 folded in)."""
    M = Nb * Ho * Wo
    taps = []
    for ky in range(3):
        for kx in range(3):
            a, b = ky % 2, kx % 2
            i0, j0 = ky // 2, kx // 2
            c0 = (a * 2 + b) * Cin
            taps.append(ph_ref[:, i0:i0 + Ho, j0:j0 + Wo, c0:c0 + Cin].reshape(M, Cin))
    patches = jnp.concatenate(taps, axis=-1).astype(jnp.bfloat16)   # (M, 9*Cin) -- Cin=3, tiny
    acc = jnp.dot(patches, w_ref[...], preferred_element_type=jnp.float32)
    acc = _leaky(acc + b_ref[...])
    o_ref[...] = acc.reshape(Nb, Ho, Wo, -1).astype(o_ref.dtype)


def backbone_stride2_conv(x_nhwc, w, b):
    """TODO(synk): stand-in for the pretrained FRCNN_FPN backbone (feature_level=1);
    a single 3x3 stride-2 conv(3->256) + LeakyReLU, output bf16 NHWC.
    TODO(synk): the pad + space-to-depth pre-pass stays in XLA (cheap 3-channel input); folding
    it into the kernel needs stride-2 VMEM slicing and is not worth it for this stand-in."""
    N, H, W, Cin = x_nhwc.shape
    assert H % 2 == 0 and W % 2 == 0
    Cout = w.shape[-1]
    Ho, Wo = H // 2, W // 2

    nb = _pick_block_frames(N, NB_BACKBONE_FRAMES)
    Npad = -(-N // nb) * nb

    xp = jnp.pad(x_nhwc, ((0, 0), (1, 1), (1, 1), (0, 0)))          # cheap (3-channel) pad
    Hh, Wh = (H + 2) // 2, (W + 2) // 2
    phases = xp.reshape(N, Hh, 2, Wh, 2, Cin).transpose(0, 1, 3, 2, 4, 5)
    phases = phases.reshape(N, Hh, Wh, 4 * Cin)
    if Npad != N:
        phases = jnp.pad(phases, ((0, Npad - N), (0, 0), (0, 0), (0, 0)))

    w_flat = w.reshape(9 * Cin, Cout).astype(jnp.bfloat16)
    b2 = b.reshape(1, Cout)
    kernel = functools.partial(_backbone_s2_kernel, Nb=nb, Ho=Ho, Wo=Wo, Cin=Cin)
    feats = pl.pallas_call(
        kernel,
        out_shape=jax.ShapeDtypeStruct((Npad, Ho, Wo, Cout), jnp.bfloat16),
        grid=(Npad // nb,),
        in_specs=[
            pl.BlockSpec((nb, Hh, Wh, 4 * Cin), lambda n: (n, 0, 0, 0)),
            pl.BlockSpec((9 * Cin, Cout), lambda n: (0, 0)),
            pl.BlockSpec((1, Cout), lambda n: (0, 0)),
        ],
        out_specs=pl.BlockSpec((nb, Ho, Wo, Cout), lambda n: (n, 0, 0, 0)),
        compiler_params=pltpu.CompilerParams(
            dimension_semantics=("parallel",), vmem_limit_bytes=VMEM_LIMIT),
    )(phases, w_flat, b2)
    return feats[:N]


# -------------- fused conv_redir + correlation + conv chain kernel ----------
def _corr_conv_kernel(f1_ref, f2_ref, wred_ref, bred_ref, w31_ref, b31_ref,
                      w4_ref, b4_ref, w41_ref, b41_ref, o_ref,
                      f2pad, pad_a, pad_b, pad_c, *, Nb, H, W, P, dil):
    """Per Nb-frame block: conv_redir(1x1) -> cat with correlation -> conv3_1 -> conv4 ->
    conv4_1, all LeakyReLU(0.1); padded intermediates stay resident in VMEM scratch.
    Only the halo rings are zeroed (interiors fully rewritten every step)."""
    C = f1_ref.shape[-1]
    HW = H * W
    M = Nb * HW
    rd = ((P - 1) // 2) * dil

    # halo rings only (cheap; re-done per step so it is megacore-safe with 'parallel' grids)
    _zero_halo(f2pad, rd)
    _zero_halo(pad_a, 1)
    _zero_halo(pad_b, 1)
    _zero_halo(pad_c, 1)

    f1 = f1_ref[...]                                                # (Nb, H, W, C) bf16

    # conv_redir: one bf16 MXU matmul over M = Nb*H*W rows (256 -> 32) + LeakyReLU
    redir = jnp.dot(f1.reshape(M, C), wred_ref[...],
                    preferred_element_type=jnp.float32)
    redir = _leaky(redir + bred_ref[...])                           # (M, 32) f32
    pad_a[:, 1:H + 1, 1:W + 1, 0:REDIR_CH] = redir.reshape(Nb, H, W, REDIR_CH)

    # next-frame features with halo handled in VMEM (no HBM pad pass)
    # TODO(synk): keep this scratch bf16 on v7x (64 MiB VMEM) once row tiling is added.
    f2pad[:, rd:rd + H, rd:rd + W, :] = f2_ref[...].astype(jnp.float32)

    # FlowNet correlation: P*P displacements, /C, LeakyReLU (matches tracktor's correlate()).
    # Each displacement is written straight at its static lane offset -> no width-1 lane concat.
    f1f = f1.astype(jnp.float32)
    inv_c = 1.0 / C
    d = 0
    for dy in range(P):
        for dx in range(P):
            f2s = f2pad[:, dy * dil:dy * dil + H, dx * dil:dx * dil + W, :]
            col = jnp.sum(f1f * f2s, axis=-1, keepdims=True) * inv_c    # (Nb, H, W, 1) f32
            lane = REDIR_CH + d
            pad_a[:, 1:H + 1, 1:W + 1, lane:lane + 1] = _leaky(col)
            d += 1

    def conv3x3(src, w_ref, b_ref):
        # 9 per-tap bf16 matmuls accumulated in f32 (no lane concat of 41/32-ch patches)
        cin = src.shape[-1]
        cout = w_ref.shape[-1]
        acc = jnp.zeros((M, cout), jnp.float32)
        t = 0
        for ky in range(3):
            for kx in range(3):
                tap = src[:, ky:ky + H, kx:kx + W, :].reshape(M, cin).astype(jnp.bfloat16)
                acc = acc + jnp.dot(tap, w_ref[t], preferred_element_type=jnp.float32)
                t += 1
        return _leaky(acc + b_ref[...])

    out31 = conv3x3(pad_a, w31_ref, b31_ref)                        # (M, 32)
    pad_b[:, 1:H + 1, 1:W + 1, :] = out31.reshape(Nb, H, W, -1)

    out4 = conv3x3(pad_b, w4_ref, b4_ref)                           # (M, 32)
    pad_c[:, 1:H + 1, 1:W + 1, :] = out4.reshape(Nb, H, W, -1)

    out41 = conv3x3(pad_c, w41_ref, b41_ref)                        # (M, n_box_channels)
    # lane-dense output block (Nb, H*W*4); wrapper reshapes back to NHWC for RoIAlign
    o_ref[0] = out41.reshape(Nb, HW * N_BOX_CHANNELS).astype(o_ref.dtype)


def fused_corr_conv(f1, f2, chain_params, corr_args, nb):
    """f1 = features[keep], f2 = features[keep+1]; both (Kp, H, W, 256) bf16, Kp % nb == 0.
    Returns conv4_1 output (Kp, H, W, n_box_channels) f32."""
    Kp, H, W, C = f1.shape
    assert Kp % nb == 0
    G = Kp // nb
    P = corr_args['patch_size']
    dil = corr_args['dilation_patch']
    rd = ((P - 1) // 2) * dil
    c41 = REDIR_CH + P * P
    HWc = H * W * N_BOX_CHANNELS
    wred, bred, w31, b31, w4, b4, w41, b41 = chain_params
    kernel = functools.partial(_corr_conv_kernel, Nb=nb, H=H, W=W, P=P, dil=dil)

    def wspec(arr):
        shp = arr.shape
        return pl.BlockSpec(shp, lambda n: (0,) * len(shp))

    out = pl.pallas_call(
        kernel,
        out_shape=jax.ShapeDtypeStruct((G, nb, HWc), jnp.float32),
        grid=(G,),
        in_specs=[
            pl.BlockSpec((nb, H, W, C), lambda n: (n, 0, 0, 0)),
            pl.BlockSpec((nb, H, W, C), lambda n: (n, 0, 0, 0)),
            wspec(wred), wspec(bred),
            wspec(w31), wspec(b31),
            wspec(w4), wspec(b4),
            wspec(w41), wspec(b41),
        ],
        out_specs=pl.BlockSpec((1, nb, HWc), lambda n: (n, 0, 0)),
        scratch_shapes=[
            pltpu.VMEM((nb, H + 2 * rd, W + 2 * rd, C), jnp.float32),    # padded f2
            pltpu.VMEM((nb, H + 2, W + 2, c41), jnp.float32),            # padded in_conv3_1
            pltpu.VMEM((nb, H + 2, W + 2, CONV_CHANNELS), jnp.float32),  # padded out_conv3
            pltpu.VMEM((nb, H + 2, W + 2, CONV_CHANNELS), jnp.float32),  # padded out_conv4
        ],
        compiler_params=pltpu.CompilerParams(
            dimension_semantics=("parallel",), vmem_limit_bytes=VMEM_LIMIT),
    )(f1, f2, wred, bred, w31, b31, w4, b4, w41, b41)
    return out.reshape(Kp, H, W, N_BOX_CHANNELS)


# ------------- fused encoder LSTM + decoder step + Linear kernel -------------
def _seq2seq_kernel(xseq_ref, decin_ref, ewih_ref, ewhh_ref, eb_ref,
                    dwih_ref, dwhh_ref, db_ref, lw_ref, lb_ref, out_ref, *, L, H):
    Bp = xseq_ref.shape[1]
    In = xseq_ref.shape[2]

    # encoder: input projection hoisted OUT of the recurrent loop (one matmul for all t)
    # bias = b_ih + b_hh of a converted torch nn.LSTM checkpoint
    xproj = jnp.dot(xseq_ref[...].reshape(L * Bp, In), ewih_ref[...],
                    preferred_element_type=jnp.float32) + eb_ref[...]
    xproj = xproj.reshape(L, Bp, 4 * H)
    ewhh = ewhh_ref[...]                                  # (H, 4H)

    h = jnp.zeros((Bp, H), jnp.float32)
    c = jnp.zeros((Bp, H), jnp.float32)
    for t in range(L):                                    # static, fully unrolled
        # ONE fused recurrent matmul per step; gates sliced from the 128-lane result
        g = xproj[t] + jnp.dot(h, ewhh, preferred_element_type=jnp.float32)   # (Bp, 4H)
        i = jax.nn.sigmoid(g[:, 0:H])
        f = jax.nn.sigmoid(g[:, H:2 * H])
        gg = jnp.tanh(g[:, 2 * H:3 * H])
        o = jax.nn.sigmoid(g[:, 3 * H:4 * H])
        c = f * c + i * gg
        h = o * jnp.tanh(c)

    # decoder: single LSTM step with h0 = encoder h_n, c0 = 0 (so f-gate * c0 == 0)
    dg = (jnp.dot(decin_ref[...], dwih_ref[...], preferred_element_type=jnp.float32)
          + db_ref[...]
          + jnp.dot(h, dwhh_ref[...], preferred_element_type=jnp.float32))    # (Bp, 4H)
    di = jax.nn.sigmoid(dg[:, 0:H])
    dgg = jnp.tanh(dg[:, 2 * H:3 * H])
    do = jax.nn.sigmoid(dg[:, 3 * H:4 * H])
    c1 = di * dgg
    h1 = do * jnp.tanh(c1)

    # linear(relu(sum over layers of h))  -- n_layers = 1
    relu_h = jnp.maximum(h1, 0.0)
    out_ref[...] = jnp.dot(relu_h, lw_ref[...],
                           preferred_element_type=jnp.float32) + lb_ref[...]


def seq2seq_head(encoder_in, decoder_in, params):
    B, L, _ = encoder_in.shape
    Bp = -(-B // 8) * 8                                   # pad batch rows to 8 sublanes
    if Bp != B:
        encoder_in = jnp.pad(encoder_in, ((0, Bp - B), (0, 0), (0, 0)))
        decoder_in = jnp.pad(decoder_in, ((0, Bp - B), (0, 0)))
    xseq = jnp.transpose(encoder_in, (1, 0, 2))           # time-major (L, Bp, In)
    kernel = functools.partial(_seq2seq_kernel, L=L, H=HIDDEN_SIZE)
    vmem = lambda: pl.BlockSpec(memory_space=pltpu.MemorySpace.VMEM)
    out = pl.pallas_call(
        kernel,
        out_shape=jax.ShapeDtypeStruct((Bp, OUTPUT_SIZE), jnp.float32),
        in_specs=[vmem() for _ in range(10)],
        out_specs=vmem(),
    )(xseq, decoder_in,
      params['enc_wih'], params['enc_whh'], params['enc_b'],
      params['dec_wih'], params['dec_whh'], params['dec_b'],
      params['lin_w'], params['lin_b'])
    return out[:B]


# ------------------------- RoIAlign (plain-JAX glue) -------------------------
# TODO(synk): MultiScaleRoIAlign gather-based bilinear sampling stays in plain JAX.
def roi_align_avg(feat_nhwc, boxes, spatial_scale, output_size, sampling_ratio):
    """RoIAlign (aligned=False) + mean over all spatial bins (avg_box_features=True).
    Single spatial_scale for both axes (torchvision MultiScaleRoIAlign asserts H/W scales match)."""
    K, Hf, Wf, C = feat_nhwc.shape
    n = output_size * sampling_ratio

    def one(feat, box):
        bx = box * spatial_scale
        x1, y1, x2, y2 = bx[0], bx[1], bx[2], bx[3]
        roi_w = jnp.maximum(x2 - x1, 1.0)
        roi_h = jnp.maximum(y2 - y1, 1.0)
        ys = y1 + (jnp.arange(n, dtype=jnp.float32) + 0.5) * roi_h / n
        xs = x1 + (jnp.arange(n, dtype=jnp.float32) + 0.5) * roi_w / n
        yy, xx = jnp.meshgrid(ys, xs, indexing='ij')

        def bilinear(y, x):
            valid = (y > -1.0) & (y < Hf) & (x > -1.0) & (x < Wf)
            y = jnp.clip(y, 0.0, Hf - 1.0)
            x = jnp.clip(x, 0.0, Wf - 1.0)
            y0 = jnp.floor(y).astype(jnp.int32)
            x0 = jnp.floor(x).astype(jnp.int32)
            y1i = jnp.minimum(y0 + 1, Hf - 1)
            x1i = jnp.minimum(x0 + 1, Wf - 1)
            ly, lx = y - y0, x - x0
            hy, hx = 1.0 - ly, 1.0 - lx
            v = (feat[y0, x0] * hy * hx + feat[y0, x1i] * hy * lx
                 + feat[y1i, x0] * ly * hx + feat[y1i, x1i] * ly * lx)
            return jnp.where(valid, v, 0.0)

        vals = jax.vmap(jax.vmap(bilinear))(yy, xx)          # (n, n, C)
        return vals.mean(axis=(0, 1))                        # (C,)

    return jax.vmap(one)(feat_nhwc, boxes)                   # (K, C)


# ------------------------------ parameters ----------------------------------
def init_params(key):
    ks = jax.random.split(key, 18)
    w = lambda k, shape, s=0.05: (jax.random.normal(k, shape) * s).astype(jnp.float32)
    in_planes = CORR_ARGS['patch_size'] ** 2 + (0 if CORRELATION_ONLY else 32)
    return dict(
        backbone_w=w(ks[0], (3, 3, 3, BACKBONE_CH)),  backbone_b=w(ks[1], (BACKBONE_CH,)),
        redir_w=w(ks[2], (1, 1, BACKBONE_CH, REDIR_CH)), redir_b=w(ks[3], (REDIR_CH,)),
        conv3_1_w=w(ks[4], (3, 3, in_planes, CONV_CHANNELS)),
        conv3_1_b=w(ks[5], (CONV_CHANNELS,)),
        conv4_w=w(ks[6], (3, 3, CONV_CHANNELS, CONV_CHANNELS)),
        conv4_b=w(ks[7], (CONV_CHANNELS,)),
        conv4_1_w=w(ks[8], (3, 3, CONV_CHANNELS, N_BOX_CHANNELS)),
        conv4_1_b=w(ks[9], (N_BOX_CHANNELS,)),
        # LSTM biases = b_ih + b_hh of the torch checkpoint (summed at conversion time)
        enc_wih=w(ks[10], (INPUT_SIZE, 4 * HIDDEN_SIZE), 0.1),
        enc_whh=w(ks[11], (HIDDEN_SIZE, 4 * HIDDEN_SIZE), 0.1),
        enc_b=w(ks[12], (1, 4 * HIDDEN_SIZE), 0.1),
        dec_wih=w(ks[13], (INPUT_SIZE, 4 * HIDDEN_SIZE), 0.1),
        dec_whh=w(ks[14], (HIDDEN_SIZE, 4 * HIDDEN_SIZE), 0.1),
        dec_b=w(ks[15], (1, 4 * HIDDEN_SIZE), 0.1),
        lin_w=w(ks[16], (HIDDEN_SIZE, OUTPUT_SIZE), 0.1),
        lin_b=w(ks[17], (1, OUTPUT_SIZE), 0.1),
    )


# ------------------------------ forward pass ---------------------------------
def image_correlation_forward(params, diffs, boxes_target, boxes_resized,
                              image_features, image_sizes, lengths):
    """Mirrors ImageCorrelationModel.forward (backbone features stored bf16 -> results match the
    f32 PyTorch reference only to bf16 tolerance).
    diffs: (B, L, 6); boxes_target: (B, 1, 4); boxes_resized: (T, 4) xyxy;
    image_features: (T, 3, Himg, Wimg) NCHW frames; image_sizes: list of (H, W);
    lengths: python list of per-track frame counts (sum == T)."""
    B, L, F = diffs.shape

    # --- backbone stand-in (stride-2 folded into the conv kernel; bf16 features) ---
    x = jnp.transpose(image_features, (0, 2, 3, 1))                 # NCHW -> NHWC
    feats = backbone_stride2_conv(x, params['backbone_w'], params['backbone_b'])
    T, Hf, Wf, C = feats.shape

    # --- prepare_decoder index bookkeeping (host-side) ---
    bounds = list(np.cumsum(np.asarray(lengths)) - 1)
    keep = sorted(set(range(T - 1)) - set(bounds[:-1]))
    keep_np = np.asarray(keep, dtype=np.int32)
    K = len(keep)

    # frame batching for the fused kernel: pad K to a multiple of nb via repeated last index
    nb = _pick_block_frames(K, NB_CORR_FRAMES)
    Kp = -(-K // nb) * nb
    if Kp > K:
        idx = np.concatenate([keep_np, np.full(Kp - K, keep_np[-1], dtype=np.int32)])
    else:
        idx = keep_np
    f1 = feats[idx]                                                 # frames t
    f2 = feats[idx + 1]                                             # frames t + 1

    P = CORR_ARGS['patch_size']
    in_planes = REDIR_CH + P * P
    chain_params = (
        params['redir_w'].reshape(BACKBONE_CH, REDIR_CH).astype(jnp.bfloat16),
        params['redir_b'].reshape(1, REDIR_CH),
        params['conv3_1_w'].reshape(9, in_planes, CONV_CHANNELS).astype(jnp.bfloat16),
        params['conv3_1_b'].reshape(1, CONV_CHANNELS),
        params['conv4_w'].reshape(9, CONV_CHANNELS, CONV_CHANNELS).astype(jnp.bfloat16),
        params['conv4_b'].reshape(1, CONV_CHANNELS),
        params['conv4_1_w'].reshape(9, CONV_CHANNELS, N_BOX_CHANNELS).astype(jnp.bfloat16),
        params['conv4_1_b'].reshape(1, N_BOX_CHANNELS),
    )
    out_conv4 = fused_corr_conv(f1, f2, chain_params, CORR_ARGS, nb)[:K]   # (K, Hf, Wf, 4)

    img_h = float(image_sizes[0][0])
    spatial_scale = Hf / img_h
    box_features = roi_align_avg(out_conv4, boxes_resized[keep_np],
                                 spatial_scale, ROI_OUTPUT_SIZE, 2)  # (K, n_box_channels)

    corr_lengths = [l - 1 for l in lengths]
    target_idc = [int(t) for t in (np.cumsum(np.asarray(corr_lengths)) - 1)]
    in_idc = sorted(set(range(K)) - set(target_idc))

    encoder_in = jnp.zeros((B, L, INPUT_SIZE), jnp.float32)
    encoder_in = encoder_in.at[:, :, :F].set(diffs)
    mask_b, mask_l = [], []
    for i, l in enumerate(corr_lengths):
        if l - 1 > 0:
            for j in range(L - (l - 1), L):
                mask_b.append(i)
                mask_l.append(j)
    if len(in_idc) > 0 and not CORRELATION_LAST_ONLY and len(mask_b) > 0:
        assert len(mask_b) == len(in_idc)               # same per-track counts as the torch ref
        bf_in = box_features[np.asarray(in_idc)].reshape(len(in_idc), -1)
        # single vectorized scatter instead of per-element .at[].set
        encoder_in = encoder_in.at[np.asarray(mask_b), np.asarray(mask_l), F:].set(bf_in)

    decoder_in = jnp.zeros((B, INPUT_SIZE), jnp.float32)
    decoder_in = decoder_in.at[:, F - 2].set(1.0)
    bf_t = box_features[np.asarray(target_idc)].reshape(B, -1)
    decoder_in = decoder_in.at[:, F:].set(bf_t)

    # encoder LSTM + decoder step + Linear fused into one Pallas call
    assert boxes_target.shape[1] == 1
    out = seq2seq_head(encoder_in, decoder_in, params)               # (B, 6)
    return out[:, None, :]                                           # (B, 1, 6)


# ----------------------------------- main ------------------------------------
if __name__ == "__main__":
    key = jax.random.PRNGKey(0)
    k_p, k_d, k_b, k_img = jax.random.split(key, 4)

    B = 2                       # tracks
    L = INPUT_LENGTH            # 8
    lengths = [4, 4]            # frames per track
    T = sum(lengths)            # 8 total frames
    IMG = 16

    params = init_params(k_p)

    diffs = (jax.random.normal(k_d, (B, L, F_DIM)) * 0.1).astype(jnp.float32)
    boxes_target = jnp.zeros((B, 1, 4), jnp.float32)
    base_box = jnp.array([2.0, 2.0, 11.0, 12.0], jnp.float32)
    boxes_resized = (base_box[None, :]
                     + jax.random.uniform(k_b, (T, 4), minval=0.0, maxval=1.0)).astype(jnp.float32)
    image_features = jax.random.normal(k_img, (T, 3, IMG, IMG)).astype(jnp.float32)
    image_sizes = [(IMG, IMG)] * T

    out = image_correlation_forward(params, diffs, boxes_target, boxes_resized,
                                    image_features, image_sizes, lengths)
    out = jax.block_until_ready(out)
    assert out.shape == (B, 1, OUTPUT_SIZE), out.shape
    assert bool(jnp.all(jnp.isfinite(out)))
    print("KERNEL_OK")
</pallas_src>

<mosaic_0001>
module attributes {stable_mosaic.version = 11 : i64} {
  func.func @_backbone_s2_kernel(%arg0: i32, %arg1: memref<4x9x9x12xf32, #tpu.memory_space<vmem>>, %arg2: memref<27x256xbf16, #tpu.memory_space<vmem>>, %arg3: memref<1x256xf32, #tpu.memory_space<vmem>>, %arg4: memref<4x8x8x256xbf16, #tpu.memory_space<vmem>>) attributes {dimension_semantics = [#tpu.dimension_semantics<parallel>], iteration_bounds = array<i64: 2>, scalar_prefetch = 0 : i64, scratch_operands = 0 : i64, tpu.core_type = #tpu.core_type<tc>, window_params = [{transform_indices = @transform_0, window_bounds = array<i64: 4, 9, 9, 12>}, {pipeline_mode = #tpu.pipeline_mode<synchronous>, transform_indices = @transform_1, window_bounds = array<i64: 27, 256>}, {pipeline_mode = #tpu.pipeline_mode<synchronous>, transform_indices = @transform_2, window_bounds = array<i64: 1, 256>}, {transform_indices = @transform_3, window_bounds = array<i64: 4, 8, 8, 256>}]} {
    %c0 = arith.constant 0 : index
    %c0_0 = arith.constant 0 : index
    %c0_1 = arith.constant 0 : index
    %c0_2 = arith.constant 0 : index
    %0 = vector.load %arg1[%c0, %c0_0, %c0_1, %c0_2] : memref<4x9x9x12xf32, #tpu.memory_space<vmem>>, vector<4x8x8x3xf32>
    %1 = vector.shape_cast %0 : vector<4x8x8x3xf32> to vector<256x3xf32>
    %c0_3 = arith.constant 0 : index
    %c0_4 = arith.constant 0 : index
    %c0_5 = arith.constant 0 : index
    %c3 = arith.constant 3 : index
    %2 = vector.load %arg1[%c0_3, %c0_4, %c0_5, %c3] : memref<4x9x9x12xf32, #tpu.memory_space<vmem>>, vector<4x8x8x3xf32>
    %3 = vector.shape_cast %2 : vector<4x8x8x3xf32> to vector<256x3xf32>
    %c0_6 = arith.constant 0 : index
    %c0_7 = arith.constant 0 : index
    %c1 = arith.constant 1 : index
    %c0_8 = arith.constant 0 : index
    %4 = vector.load %arg1[%c0_6, %c0_7, %c1, %c0_8] : memref<4x9x9x12xf32, #tpu.memory_space<vmem>>, vector<4x8x8x3xf32>
    %5 = vector.shape_cast %4 : vector<4x8x8x3xf32> to vector<256x3xf32>
    %c0_9 = arith.constant 0 : index
    %c0_10 = arith.constant 0 : index
    %c0_11 = arith.constant 0 : index
    %c6 = arith.constant 6 : index
    %6 = vector.load %arg1[%c0_9, %c0_10, %c0_11, %c6] : memref<4x9x9x12xf32, #tpu.memory_space<vmem>>, vector<4x8x8x3xf32>
    %7 = vector.shape_cast %6 : vector<4x8x8x3xf32> to vector<256x3xf32>
    %c0_12 = arith.constant 0 : index
    %c0_13 = arith.constant 0 : index
    %c0_14 = arith.constant 0 : index
    %c9 = arith.constant 9 : index
    %8 = vector.load %arg1[%c0_12, %c0_13, %c0_14, %c9] : memref<4x9x9x12xf32, #tpu.memory_space<vmem>>, vector<4x8x8x3xf32>
    %9 = vector.shape_cast %8 : vector<4x8x8x3xf32> to vector<256x3xf32>
    %c0_15 = arith.constant 0 : index
    %c0_16 = arith.constant 0 : index
    %c1_17 = arith.constant 1 : index
    %c6_18 = arith.constant 6 : index
    %10 = vector.load %arg1[%c0_15, %c0_16, %c1_17, %c6_18] : memref<4x9x9x12xf32, #tpu.memory_space<vmem>>, vector<4x8x8x3xf32>
    %11 = vector.shape_cast %10 : vector<4x8x8x3xf32> to vector<256x3xf32>
    %c0_19 = arith.constant 0 : index
    %c1_20 = arith.constant 1 : index
    %c0_21 = arith.constant 0 : index
    %c0_22 = arith.constant 0 : index
    %12 = vector.load %arg1[%c0_19, %c1_20, %c0_21, %c0_22] : memref<4x9x9x12xf32, #tpu.memory_space<vmem>>, vector<4x8x8x3xf32>
    %13 = vector.shape_cast %12 : vector<4x8x8x3xf32> to vector<256x3xf32>
    %c0_23 = arith.constant 0 : index
    %c1_24 = arith.constant 1 : index
    %c0_25 = arith.constant 0 : index
    %c3_26 = arith.constant 3 : index
    %14 = vector.load %arg1[%c0_23, %c1_24, %c0_25, %c3_26] : memref<4x9x9x12xf32, #tpu.memory_space<vmem>>, vector<4x8x8x3xf32>
    %15 = vector.shape_cast %14 : vector<4x8x8x3xf32> to vector<256x3xf32>
    %c0_27 = arith.constant 0 : index
    %c1_28 = arith.constant 1 : index
    %c1_29 = arith.constant 1 : index
    %c0_30 = arith.constant 0 : index
    %16 = vector.load %arg1[%c0_27, %c1_28, %c1_29, %c0_30] : memref<4x9x9x12xf32, #tpu.memory_space<vmem>>, vector<4x8x8x3xf32>
    %17 = vector.shape_cast %16 : vector<4x8x8x3xf32> to vector<256x3xf32>
    %18 = tpu.concatenate %1, %3, %5, %7, %9, %11, %13, %15, %17 in 1 : vector<256x3xf32>, vector<256x3xf32>, vector<256x3xf32>, vector<256x3xf32>, vector<256x3xf32>, vector<256x3xf32>, vector<256x3xf32>, vector<256x3xf32>, vector<256x3xf32> -> vector<256x27xf32>
    %19 = arith.truncf %18 : vector<256x27xf32> to vector<256x27xbf16>
    %c0_31 = arith.constant 0 : index
    %c0_32 = arith.constant 0 : index
    %20 = vector.load %arg2[%c0_31, %c0_32] : memref<27x256xbf16, #tpu.memory_space<vmem>>, vector<27x256xbf16>
    %cst = arith.constant dense<0.000000e+00> : vector<256x256xf32>
    %21 = tpu.matmul %19, %20, %cst {dimension_numbers = #tpu.dot_dimension_numbers<[1], [0], [0], [1], [0, 0, 1, 1], [], []>} : vector<256x27xbf16>, vector<27x256xbf16>, vector<256x256xf32> -> vector<256x256xf32>
    %c0_33 = arith.constant 0 : index
    %c0_34 = arith.constant 0 : index
    %22 = vector.load %arg3[%c0_33, %c0_34] : memref<1x256xf32, #tpu.memory_space<vmem>>, vector<1x256xf32>
    %23 = vector.broadcast %22 : vector<1x256xf32> to vector<256x256xf32>
    %24 = arith.addf %21, %23 : vector<256x256xf32>
    %cst_35 = arith.constant 0.000000e+00 : f32
    %25 = vector.broadcast %cst_35 : f32 to vector<256x256xf32>
    %26 = arith.cmpf oge, %24, %25 : vector<256x256xf32>
    %cst_36 = arith.constant 1.000000e-01 : f32
    %27 = vector.broadcast %cst_36 : f32 to vector<256x256xf32>
    %28 = arith.mulf %27, %24 : vector<256x256xf32>
    %29 = arith.select %26, %24, %28 : vector<256x256xi1>, vector<256x256xf32>
    %30 = vector.shape_cast %29 : vector<256x256xf32> to vector<4x8x8x256xf32>
    %31 = arith.truncf %30 : vector<4x8x8x256xf32> to vector<4x8x8x256xbf16>
    %c0_37 = arith.constant 0 : index
    %c0_38 = arith.constant 0 : index
    %c0_39 = arith.constant 0 : index
    %c0_40 = arith.constant 0 : index
    %32 = vector.load %arg4[%c0_37, %c0_38, %c0_39, %c0_40] : memref<4x8x8x256xbf16, #tpu.memory_space<vmem>>, vector<4x8x8x256xbf16>
    tpu.vector_store %arg4[%c0_37, %c0_38, %c0_39, %c0_40], %31 {strides = array<i32>} : memref<4x8x8x256xbf16, #tpu.memory_space<vmem>>, vector<4x8x8x256xbf16>,
    return
  }
  func.func @transform_0(%arg0: i32) -> (i32, i32, i32, i32) {
    %c0_i32 = arith.constant 0 : i32
    %c0_i32_0 = arith.constant 0 : i32
    %c0_i32_1 = arith.constant 0 : i32
    %c0_i32_2 = arith.constant 0 : i32
    return %arg0, %c0_i32, %c0_i32_0, %c0_i32_1 : i32, i32, i32, i32
  }
  func.func @transform_1(%arg0: i32) -> (i32, i32) {
    %c0_i32 = arith.constant 0 : i32
    %c0_i32_0 = arith.constant 0 : i32
    %c0_i32_1 = arith.constant 0 : i32
    return %c0_i32, %c0_i32_0 : i32, i32
  }
  func.func @transform_2(%arg0: i32) -> (i32, i32) {
    %c0_i32 = arith.constant 0 : i32
    %c0_i32_0 = arith.constant 0 : i32
    %c0_i32_1 = arith.constant 0 : i32
    return %c0_i32, %c0_i32_0 : i32, i32
  }
  func.func @transform_3(%arg0: i32) -> (i32, i32, i32, i32) {
    %c0_i32 = arith.constant 0 : i32
    %c0_i32_0 = arith.constant 0 : i32
    %c0_i32_1 = arith.constant 0 : i32
    %c0_i32_2 = arith.constant 0 : i32
    return %arg0, %c0_i32, %c0_i32_0, %c0_i32_1 : i32, i32, i32, i32
  }
}

</mosaic_0001>

<llo_original>
// kernel: tpu_custom_call.1
$region0: #{tpu_custom_call.1}
  #allocation0 [shape = 'u32[]', space=smem, size = 0x4, offset = 0x4, fixed_abs, tag = 'smem constant byte address 0x4 - core index']
  #allocation1 [shape = 'u32[72,128]{1,0:T(1,128)}', space=vmem, size = 0x9000, scoped, tag = 'internal scratch']
  %s0 = inlined_call_operand.vmem [shape: f32[8,9,9,12], index: 0, kind: input, shape index: {}]
  %s1 = inlined_call_operand.vmem [shape: bf16[27,256], index: 1, kind: input, shape index: {}]
  %s2 = inlined_call_operand.vmem [shape: f32[1,256], index: 2, kind: input, shape index: {}]
  %s3 = inlined_call_operand.hbm [shape: bf16[8,8,8,256], index: 3, kind: output, shape index: {}]
  %s4 = sld [smem:[#allocation0]]
  $region45: #{tpu_custom_call.1} parent=0
    _
  %s6 = ssub.s32 1, %s4
  %s7 = scalar_select 0, %s6, %s4
  $region1: #{tpu_custom_call.1} parent=0
    #allocation2 [shape = 'u8[262144]{0}', space=vmem, size = 0x40000, scoped, tag = 'output window, operand 0']
    #allocation3 [shape = 's32[2]{0}', space=sflag, size = 0x8, scoped, tag = 'scoped memory for tpu_custom_call.1']
    %8 = vsyncpa [#allocation3], 0
    %s9 = scalar_lea.sflag [#allocation3], 1
    %10 = vsyncpa %s9, 0
    loop: start=0, step=1, limit=4
    $region2: #{tpu_custom_call.1} parent=1 // loop_pre_header
      _
    $region3: #{tpu_custom_call.1} parent=1 // loop_header
      %s12 = sphi 0, %s16
      %p13 = scmp.ge.s32.totalorder %s12, 4
      %s22 = sphi 0, %s24
      %s25 = sphi 0, %s22
      %s26 = sphi 0, %s25
      %s42 = sphi 0, %s26
      %s46 = sphi 0, %s46
      %s48 = sphi 0, %s46
      %s49 = sphi 0, %s48
      %s63 = sphi 0, %s49
      %s67 = sphi 0, %s67
      %s69 = sphi 0, %s67
      %s70 = sphi 0, %s69
      %s84 = sphi 0, %s70
      %s90 = sphi 0, %s92
      %s93 = sphi 0, %s90
      %s94 = sphi 0, %s93
      %s110 = sphi 0, %s94
    $region4: #{tpu_custom_call.1} parent=1 // loop_header_branch
      %15 = sbr.rel (%p13) target = $region8
    $region5: #{tpu_custom_call.1} parent=1 // loop_body
      %s17 = ssub.s32 %s12, 1
      %s18 = ssub.s32 %s12, 2
      %s19 = sadd.s32 %s12, 1
      %s20 = ssub.s32 %s12, %s19
      %p21 = scmp.eq.s32.totalorder %s20, 0
      %s23 = sadd.s32 %s22, 1
      %s24 = scalar_select %p21, %s22, %s23
      %p27 = pneg %p21
      %p28 = scmp.eq.s32.totalorder %s12, 1
      %p29 = por %p27, %p28
      %p30 = scmp.ne.s32.totalorder %s22, %s25
      %p31 = scmp.eq.s32.totalorder %s12, 0
      %p32 = por %p30, %p31
      %p33 = scmp.ne.s32.totalorder %s22, %s25
      %p34 = scmp.eq.s32.totalorder %s17, 1
      %p35 = por %p33, %p34
      %p36 = scmp.ne.s32.totalorder %s25, %s26
      %p37 = scmp.eq.s32.totalorder %s17, 0
      %p38 = por %p36, %p37
      %p39 = scmp.ne.s32.totalorder %s25, %s26
      %p40 = scmp.eq.s32.totalorder %s18, 1
      %p41 = por %p39, %p40
      %p43 = scmp.ne.s32.totalorder %s26, %s42
      %p44 = scmp.eq.s32.totalorder %s18, 0
      %p45 = por %p43, %p44
      %s47 = sadd.s32 %s46, 1
      %p50 = scmp.eq.s32.totalorder %s12, 1
      %p51 = scmp.ne.s32.totalorder %s46, %s48
      %p52 = scmp.eq.s32.totalorder %s12, 0
      %p53 = por %p51, %p52
      %p54 = scmp.ne.s32.totalorder %s46, %s48
      %p55 = scmp.eq.s32.totalorder %s17, 1
      %p56 = por %p54, %p55
      %p57 = scmp.ne.s32.totalorder %s48, %s49
      %p58 = scmp.eq.s32.totalorder %s17, 0
      %p59 = por %p57, %p58
      %p60 = scmp.ne.s32.totalorder %s48, %s49
      %p61 = scmp.eq.s32.totalorder %s18, 1
      %p62 = por %p60, %p61
      %p64 = scmp.ne.s32.totalorder %s49, %s63
      %p65 = scmp.eq.s32.totalorder %s18, 0
      %p66 = por %p64, %p65
      %s68 = sadd.s32 %s67, 1
      %p71 = scmp.eq.s32.totalorder %s12, 1
      %p72 = scmp.ne.s32.totalorder %s67, %s69
      %p73 = scmp.eq.s32.totalorder %s12, 0
      %p74 = por %p72, %p73
      %p75 = scmp.ne.s32.totalorder %s67, %s69
      %p76 = scmp.eq.s32.totalorder %s17, 1
      %p77 = por %p75, %p76
      %p78 = scmp.ne.s32.totalorder %s69, %s70
      %p79 = scmp.eq.s32.totalorder %s17, 0
      %p80 = por %p78, %p79
      %p81 = scmp.ne.s32.totalorder %s69, %s70
      %p82 = scmp.eq.s32.totalorder %s18, 1
      %p83 = por %p81, %p82
      %p85 = scmp.ne.s32.totalorder %s70, %s84
      %p86 = scmp.eq.s32.totalorder %s18, 0
      %p87 = por %p85, %p86
      %s88 = ssub.s32 %s12, %s19
      %p89 = scmp.eq.s32.totalorder %s88, 0
      %s91 = sadd.s32 %s90, 1
      %s92 = scalar_select %p89, %s90, %s91
      %p95 = pneg %p89
      %p96 = scmp.eq.s32.totalorder %s12, 1
      %p97 = por %p95, %p96
      %p98 = scmp.ne.s32.totalorder %s90, %s93
      %p99 = scmp.eq.s32.totalorder %s12, 0
      %p100 = por %p98, %p99
      %p101 = scmp.ne.s32.totalorder %s90, %s93
      %p102 = scmp.eq.s32.totalorder %s17, 1
      %p103 = por %p101, %p102
      %p104 = scmp.ne.s32.totalorder %s93, %s94
      %p105 = scmp.eq.s32.totalorder %s17, 0
      %p106 = por %p104, %p105
      %p107 = scmp.ne.s32.totalorder %s93, %s94
      %p108 = scmp.eq.s32.totalorder %s18, 1
      %p109 = por %p107, %p108
      %p111 = scmp.ne.s32.totalorder %s94, %s110
      %p112 = scmp.eq.s32.totalorder %s18, 0
      %p113 = por %p111, %p112
      %p114 = scmp.le.s32.totalorder 1, %s12
      %p115 = scmp.lt.s32.totalorder %s12, 3
      %p116 = pnand %p114, %p115
      %p117 = pneg %p116
      // Predicated region
      $region9: #{tpu_custom_call.1} parent=5 // pred_check
        _
      $region10: #{tpu_custom_call.1} parent=5 // pred_check_branch
        %119 = sbr.rel (%p116) target = $region12
      $region11: #{tpu_custom_call.1} parent=5 // pred_region
        %s120 = ssub.s32 %s12, 1
        // Predicated region
        $region13: #{tpu_custom_call.1} parent=11 // pred_check
          %p121 = pneg %p59
        $region14: #{tpu_custom_call.1} parent=11 // pred_check_branch
          %123 = sbr.rel (%p121) target = $region16
        $region15: #{tpu_custom_call.1} parent=11 // pred_region
          _
        $region16: #{tpu_custom_call.1} parent=11 // pred_fallthru
          _
        // Predicated region
        $region17: #{tpu_custom_call.1} parent=11 // pred_check
          %p124 = pneg %p80
        $region18: #{tpu_custom_call.1} parent=11 // pred_check_branch
          %126 = sbr.rel (%p124) target = $region20
        $region19: #{tpu_custom_call.1} parent=11 // pred_region
          _
        $region20: #{tpu_custom_call.1} parent=11 // pred_fallthru
          _
      $region12: #{tpu_custom_call.1} parent=5 // pred_fallthru
        _
      %p127 = scmp.lt.s32.totalorder %s12, 2
      // Predicated region
      $region21: #{tpu_custom_call.1} parent=5 // pred_check
        %p128 = pneg %p127
      $region22: #{tpu_custom_call.1} parent=5 // pred_check_branch
        %130 = sbr.rel (%p128) target = $region24
      $region23: #{tpu_custom_call.1} parent=5 // pred_region
        // Predicated region
        $region25: #{tpu_custom_call.1} parent=23 // pred_check
          %p131 = pneg %p32
        $region26: #{tpu_custom_call.1} parent=23 // pred_check_branch
          %133 = sbr.rel (%p131) target = $region28
        $region27: #{tpu_custom_call.1} parent=23 // pred_region
          %s134 = smul.u32 4, %s12
          %p135 = scmp.lt.s32.totalorder %s134, 7
          %s136 = scalar_select %p135, %s134, 7
          %s137 = smul.addr %s136, 18
          %s138 = smul.addr %s137, 8
          %s139 = scalar_lea.vmem %s0, %s138
          %s140 = smul.u32 4, %s12
        $region28: #{tpu_custom_call.1} parent=23 // pred_fallthru
          _
      $region24: #{tpu_custom_call.1} parent=5 // pred_fallthru
        _
      %p141 = scmp.le.s32.totalorder 1, %s12
      %p142 = scmp.lt.s32.totalorder %s12, 3
      %p143 = pnand %p141, %p142
      %p144 = pneg %p143
      // Predicated region
      $region29: #{tpu_custom_call.1} parent=5 // pred_check
        _
      $region30: #{tpu_custom_call.1} parent=5 // pred_check_branch
        %146 = sbr.rel (%p143) target = $region32
      $region31: #{tpu_custom_call.1} parent=5 // pred_region
        %s147 = ssub.s32 %s12, 1
        %s148 = smul.u32 4, %s17
        %p149 = scmp.lt.s32.totalorder %s148, 7
        %s150 = scalar_select %p149, %s148, 7
        %s151 = smul.addr %s150, 18
        %s152 = smul.addr %s151, 8
        %s153 = scalar_lea.vmem %s0, %s152
        %p154 = pneg %p38
        %p155 = pneg %p35
        %p156 = pneg %p59
        %p157 = pneg %p56
        %p158 = pneg %p80
        %p159 = pneg %p77
        %p160 = pneg %p106
        %p161 = pneg %p103
        %s162 = sand.u32 %s93, 1
        %s163 = scalar_lea.sflag [#allocation3], %s162
        %s164 = sand.u32 %s93, 1
        %s165 = smul.addr %s164, 256
        %s166 = scalar_lea.vmem [#allocation2], %s165
        %s167 = smul.u32 4, %s17
        %p168 = scmp.lt.s32.totalorder %s167, 7
        %s169 = scalar_select %p168, %s167, 7
        %s170 = smul.addr %s169, 18
        %s171 = smul.addr %s170, 8
        %s172 = scalar_lea.vmem %s0, %s171
        %s173 = smul.u32 4, %s17
        %s174 = smul.u32 4, %s17
        %v176 = vld [vmem:[%s172] sm:$0xff]
        %v177 = vld [vmem:[%s172 + $0x10] sm:$0xff]
        %v178 = vld [vmem:[%s172 + $0x20] sm:$0xff]
        %v179 = vld [vmem:[%s172 + $0x30] sm:$0xff]
        %v180 = vld [vmem:[%s172 + $0x40] sm:$0xff]
        %v181 = vld [vmem:[%s172 + $0x50] sm:$0xff]
        %v182 = vld [vmem:[%s172 + $0x60] sm:$0xff]
        %v183 = vld [vmem:[%s172 + $0x70] sm:$0xff]
        %v184 = vld [vmem:[%s172 + $0x90] sm:$0xff]
        %v185 = vld [vmem:[%s172 + $0xa0] sm:$0xff]
        %v186 = vld [vmem:[%s172 + $0xb0] sm:$0xff]
        %v187 = vld [vmem:[%s172 + $0xc0] sm:$0xff]
        %v188 = vld [vmem:[%s172 + $0xd0] sm:$0xff]
        %v189 = vld [vmem:[%s172 + $0xe0] sm:$0xff]
        %v190 = vld [vmem:[%s172 + $0xf0] sm:$0xff]
        %v191 = vld [vmem:[%s172 + $0x100] sm:$0xff]
        %v192 = vld [vmem:[%s172 + $0x120] sm:$0xff]
        %v193 = vld [vmem:[%s172 + $0x130] sm:$0xff]
        %v194 = vld [vmem:[%s172 + $0x140] sm:$0xff]
        %v195 = vld [vmem:[%s172 + $0x150] sm:$0xff]
        %v196 = vld [vmem:[%s172 + $0x160] sm:$0xff]
        %v197 = vld [vmem:[%s172 + $0x170] sm:$0xff]
        %v198 = vld [vmem:[%s172 + $0x180] sm:$0xff]
        %v199 = vld [vmem:[%s172 + $0x190] sm:$0xff]
        %v200 = vld [vmem:[%s172 + $0x1b0] sm:$0xff]
        %v201 = vld [vmem:[%s172 + $0x1c0] sm:$0xff]
        %v202 = vld [vmem:[%s172 + $0x1d0] sm:$0xff]
        %v203 = vld [vmem:[%s172 + $0x1e0] sm:$0xff]
        %v204 = vld [vmem:[%s172 + $0x1f0] sm:$0xff]
        %v205 = vld [vmem:[%s172 + $0x200] sm:$0xff]
        %v206 = vld [vmem:[%s172 + $0x210] sm:$0xff]
        %v207 = vld [vmem:[%s172 + $0x220] sm:$0xff]
        %v208 = vld [vmem:[%s172 + $0x1] sm:$0xff]
        %v209 = vld [vmem:[%s172 + $0x11] sm:$0xff]
        %v210 = vld [vmem:[%s172 + $0x21] sm:$0xff]
        %v211 = vld [vmem:[%s172 + $0x31] sm:$0xff]
        %v212 = vld [vmem:[%s172 + $0x41] sm:$0xff]
        %v213 = vld [vmem:[%s172 + $0x51] sm:$0xff]
        %v214 = vld [vmem:[%s172 + $0x61] sm:$0xff]
        %v215 = vld [vmem:[%s172 + $0x71] sm:$0xff]
        %v216 = vld [vmem:[%s172 + $0x91] sm:$0xff]
        %v217 = vld [vmem:[%s172 + $0xa1] sm:$0xff]
        %v218 = vld [vmem:[%s172 + $0xb1] sm:$0xff]
        %v219 = vld [vmem:[%s172 + $0xc1] sm:$0xff]
        %v220 = vld [vmem:[%s172 + $0xd1] sm:$0xff]
        %v221 = vld [vmem:[%s172 + $0xe1] sm:$0xff]
        %v222 = vld [vmem:[%s172 + $0xf1] sm:$0xff]
        %v223 = vld [vmem:[%s172 + $0x101] sm:$0xff]
        %v224 = vld [vmem:[%s172 + $0x121] sm:$0xff]
        %v225 = vld [vmem:[%s172 + $0x131] sm:$0xff]
        %v226 = vld [vmem:[%s172 + $0x141] sm:$0xff]
        %v227 = vld [vmem:[%s172 + $0x151] sm:$0xff]
        %v228 = vld [vmem:[%s172 + $0x161] sm:$0xff]
        %v229 = vld [vmem:[%s172 + $0x171] sm:$0xff]
        %v230 = vld [vmem:[%s172 + $0x181] sm:$0xff]
        %v231 = vld [vmem:[%s172 + $0x191] sm:$0xff]
        %v232 = vld [vmem:[%s172 + $0x1b1] sm:$0xff]
        %v233 = vld [vmem:[%s172 + $0x1c1] sm:$0xff]
        %v234 = vld [vmem:[%s172 + $0x1d1] sm:$0xff]
        %v235 = vld [vmem:[%s172 + $0x1e1] sm:$0xff]
        %v236 = vld [vmem:[%s172 + $0x1f1] sm:$0xff]
        %v237 = vld [vmem:[%s172 + $0x201] sm:$0xff]
        %v238 = vld [vmem:[%s172 + $0x211] sm:$0xff]
        %v239 = vld [vmem:[%s172 + $0x221] sm:$0xff]
        %s240 = scalar_lea.vmem %s172, 16
        %v241 = vld [vmem:[%s240] sm:$0xff]
        %v242 = vld [vmem:[%s240 + $0x10] sm:$0xff]
        %v243 = vld [vmem:[%s240 + $0x20] sm:$0xff]
        %v244 = vld [vmem:[%s240 + $0x30] sm:$0xff]
        %v245 = vld [vmem:[%s240 + $0x40] sm:$0xff]
        %v246 = vld [vmem:[%s240 + $0x50] sm:$0xff]
        %v247 = vld [vmem:[%s240 + $0x60] sm:$0xff]
        %v248 = vld [vmem:[%s240 + $0x70] sm:$0xff]
        %v249 = vld [vmem:[%s240 + $0x90] sm:$0xff]
        %v250 = vld [vmem:[%s240 + $0xa0] sm:$0xff]
        %v251 = vld [vmem:[%s240 + $0xb0] sm:$0xff]
        %v252 = vld [vmem:[%s240 + $0xc0] sm:$0xff]
        %v253 = vld [vmem:[%s240 + $0xd0] sm:$0xff]
        %v254 = vld [vmem:[%s240 + $0xe0] sm:$0xff]
        %v255 = vld [vmem:[%s240 + $0xf0] sm:$0xff]
        %v256 = vld [vmem:[%s240 + $0x100] sm:$0xff]
        %v257 = vld [vmem:[%s240 + $0x120] sm:$0xff]
        %v258 = vld [vmem:[%s240 + $0x130] sm:$0xff]
        %v259 = vld [vmem:[%s240 + $0x140] sm:$0xff]
        %v260 = vld [vmem:[%s240 + $0x150] sm:$0xff]
        %v261 = vld [vmem:[%s240 + $0x160] sm:$0xff]
        %v262 = vld [vmem:[%s240 + $0x170] sm:$0xff]
        %v263 = vld [vmem:[%s240 + $0x180] sm:$0xff]
        %v264 = vld [vmem:[%s240 + $0x190] sm:$0xff]
        %v265 = vld [vmem:[%s240 + $0x1b0] sm:$0xff]
        %v266 = vld [vmem:[%s240 + $0x1c0] sm:$0xff]
        %v267 = vld [vmem:[%s240 + $0x1d0] sm:$0xff]
        %v268 = vld [vmem:[%s240 + $0x1e0] sm:$0xff]
        %v269 = vld [vmem:[%s240 + $0x1f0] sm:$0xff]
        %v270 = vld [vmem:[%s240 + $0x200] sm:$0xff]
        %v271 = vld [vmem:[%s240 + $0x210] sm:$0xff]
        %v272 = vld [vmem:[%s240 + $0x220] sm:$0xff]
        %v273 = vld [vmem:[%s240 + $0x1] sm:$0xff]
        %v274 = vld [vmem:[%s240 + $0x11] sm:$0xff]
        %v275 = vld [vmem:[%s240 + $0x21] sm:$0xff]
        %v276 = vld [vmem:[%s240 + $0x31] sm:$0xff]
        %v277 = vld [vmem:[%s240 + $0x41] sm:$0xff]
        %v278 = vld [vmem:[%s240 + $0x51] sm:$0xff]
        %v279 = vld [vmem:[%s240 + $0x61] sm:$0xff]
        %v280 = vld [vmem:[%s240 + $0x71] sm:$0xff]
        %v281 = vld [vmem:[%s240 + $0x91] sm:$0xff]
        %v282 = vld [vmem:[%s240 + $0xa1] sm:$0xff]
        %v283 = vld [vmem:[%s240 + $0xb1] sm:$0xff]
        %v284 = vld [vmem:[%s240 + $0xc1] sm:$0xff]
        %v285 = vld [vmem:[%s240 + $0xd1] sm:$0xff]
        %v286 = vld [vmem:[%s240 + $0xe1] sm:$0xff]
        %v287 = vld [vmem:[%s240 + $0xf1] sm:$0xff]
        %v288 = vld [vmem:[%s240 + $0x101] sm:$0xff]
        %v289 = vld [vmem:[%s240 + $0x121] sm:$0xff]
        %v290 = vld [vmem:[%s240 + $0x131] sm:$0xff]
        %v291 = vld [vmem:[%s240 + $0x141] sm:$0xff]
        %v292 = vld [vmem:[%s240 + $0x151] sm:$0xff]
        %v293 = vld [vmem:[%s240 + $0x161] sm:$0xff]
        %v294 = vld [vmem:[%s240 + $0x171] sm:$0xff]
        %v295 = vld [vmem:[%s240 + $0x181] sm:$0xff]
        %v296 = vld [vmem:[%s240 + $0x191] sm:$0xff]
        %v297 = vld [vmem:[%s240 + $0x1b1] sm:$0xff]
        %v298 = vld [vmem:[%s240 + $0x1c1] sm:$0xff]
        %v299 = vld [vmem:[%s240 + $0x1d1] sm:$0xff]
        %v300 = vld [vmem:[%s240 + $0x1e1] sm:$0xff]
        %v301 = vld [vmem:[%s240 + $0x1f1] sm:$0xff]
        %v302 = vld [vmem:[%s240 + $0x201] sm:$0xff]
        %v303 = vld [vmem:[%s240 + $0x211] sm:$0xff]
        %v304 = vld [vmem:[%s240 + $0x221] sm:$0xff]
        %337 = vrot.lane.b32.xlu0 %v208, 6
        %v338 = vpop.permute.xlu0 %337
        %339 = vrot.lane.b32.xlu0 %v209, 6
        %v340 = vpop.permute.xlu0 %339
        %341 = vrot.lane.b32.xlu0 %v210, 6
        %v342 = vpop.permute.xlu0 %341
        %343 = vrot.lane.b32.xlu0 %v211, 6
        %v344 = vpop.permute.xlu0 %343
        %345 = vrot.lane.b32.xlu0 %v212, 6
        %v346 = vpop.permute.xlu0 %345
        %347 = vrot.lane.b32.xlu0 %v213, 6
        %v348 = vpop.permute.xlu0 %347
        %349 = vrot.lane.b32.xlu0 %v214, 6
        %v350 = vpop.permute.xlu0 %349
        %351 = vrot.lane.b32.xlu0 %v215, 6
        %v352 = vpop.permute.xlu0 %351
        %353 = vrot.lane.b32.xlu0 %v216, 6
        %v354 = vpop.permute.xlu0 %353
        %355 = vrot.lane.b32.xlu0 %v217, 6
        %v356 = vpop.permute.xlu0 %355
        %357 = vrot.lane.b32.xlu0 %v218, 6
        %v358 = vpop.permute.xlu0 %357
        %359 = vrot.lane.b32.xlu0 %v219, 6
        %v360 = vpop.permute.xlu0 %359
        %361 = vrot.lane.b32.xlu0 %v220, 6
        %v362 = vpop.permute.xlu0 %361
        %363 = vrot.lane.b32.xlu0 %v221, 6
        %v364 = vpop.permute.xlu0 %363
        %365 = vrot.lane.b32.xlu0 %v222, 6
        %v366 = vpop.permute.xlu0 %365
        %367 = vrot.lane.b32.xlu0 %v223, 6
        %v368 = vpop.permute.xlu0 %367
        %369 = vrot.lane.b32.xlu0 %v224, 6
        %v370 = vpop.permute.xlu0 %369
        %371 = vrot.lane.b32.xlu0 %v225, 6
        %v372 = vpop.permute.xlu0 %371
        %373 = vrot.lane.b32.xlu0 %v226, 6
        %v374 = vpop.permute.xlu0 %373
        %375 = vrot.lane.b32.xlu0 %v227, 6
        %v376 = vpop.permute.xlu0 %375
        %377 = vrot.lane.b32.xlu0 %v228, 6
        %v378 = vpop.permute.xlu0 %377
        %379 = vrot.lane.b32.xlu0 %v229, 6
        %v380 = vpop.permute.xlu0 %379
        %381 = vrot.lane.b32.xlu0 %v230, 6
        %v382 = vpop.permute.xlu0 %381
        %383 = vrot.lane.b32.xlu0 %v231, 6
        %v384 = vpop.permute.xlu0 %383
        %385 = vrot.lane.b32.xlu0 %v232, 6
        %v386 = vpop.permute.xlu0 %385
        %387 = vrot.lane.b32.xlu0 %v233, 6
        %v388 = vpop.permute.xlu0 %387
        %389 = vrot.lane.b32.xlu0 %v234, 6
        %v390 = vpop.permute.xlu0 %389
        %391 = vrot.lane.b32.xlu0 %v235, 6
        %v392 = vpop.permute.xlu0 %391
        %393 = vrot.lane.b32.xlu0 %v236, 6
        %v394 = vpop.permute.xlu0 %393
        %395 = vrot.lane.b32.xlu0 %v237, 6
        %v396 = vpop.permute.xlu0 %395
        %397 = vrot.lane.b32.xlu0 %v238, 6
        %v398 = vpop.permute.xlu0 %397
        %399 = vrot.lane.b32.xlu0 %v239, 6
        %v400 = vpop.permute.xlu0 %399
        %465 = vrot.lane.b32.xlu0 %v176, 3
        %v466 = vpop.permute.xlu0 %465
        %467 = vrot.lane.b32.xlu0 %v177, 3
        %v468 = vpop.permute.xlu0 %467
        %469 = vrot.lane.b32.xlu0 %v178, 3
        %v470 = vpop.permute.xlu0 %469
        %471 = vrot.lane.b32.xlu0 %v179, 3
        %v472 = vpop.permute.xlu0 %471
        %473 = vrot.lane.b32.xlu0 %v180, 3
        %v474 = vpop.permute.xlu0 %473
        %475 = vrot.lane.b32.xlu0 %v181, 3
        %v476 = vpop.permute.xlu0 %475
        %477 = vrot.lane.b32.xlu0 %v182, 3
        %v478 = vpop.permute.xlu0 %477
        %479 = vrot.lane.b32.xlu0 %v183, 3
        %v480 = vpop.permute.xlu0 %479
        %481 = vrot.lane.b32.xlu0 %v184, 3
        %v482 = vpop.permute.xlu0 %481
        %483 = vrot.lane.b32.xlu0 %v185, 3
        %v484 = vpop.permute.xlu0 %483
        %485 = vrot.lane.b32.xlu0 %v186, 3
        %v486 = vpop.permute.xlu0 %485
        %487 = vrot.lane.b32.xlu0 %v187, 3
        %v488 = vpop.permute.xlu0 %487
        %489 = vrot.lane.b32.xlu0 %v188, 3
        %v490 = vpop.permute.xlu0 %489
        %491 = vrot.lane.b32.xlu0 %v189, 3
        %v492 = vpop.permute.xlu0 %491
        %493 = vrot.lane.b32.xlu0 %v190, 3
        %v494 = vpop.permute.xlu0 %493
        %495 = vrot.lane.b32.xlu0 %v191, 3
        %v496 = vpop.permute.xlu0 %495
        %497 = vrot.lane.b32.xlu0 %v192, 3
        %v498 = vpop.permute.xlu0 %497
        %499 = vrot.lane.b32.xlu0 %v193, 3
        %v500 = vpop.permute.xlu0 %499
        %501 = vrot.lane.b32.xlu0 %v194, 3
        %v502 = vpop.permute.xlu0 %501
        %503 = vrot.lane.b32.xlu0 %v195, 3
        %v504 = vpop.permute.xlu0 %503
        %505 = vrot.lane.b32.xlu0 %v196, 3
        %v506 = vpop.permute.xlu0 %505
        %507 = vrot.lane.b32.xlu0 %v197, 3
        %v508 = vpop.permute.xlu0 %507
        %509 = vrot.lane.b32.xlu0 %v198, 3
        %v510 = vpop.permute.xlu0 %509
        %511 = vrot.lane.b32.xlu0 %v199, 3
        %v512 = vpop.permute.xlu0 %511
        %513 = vrot.lane.b32.xlu0 %v200, 3
        %v514 = vpop.permute.xlu0 %513
        %515 = vrot.lane.b32.xlu0 %v201, 3
        %v516 = vpop.permute.xlu0 %515
        %517 = vrot.lane.b32.xlu0 %v202, 3
        %v518 = vpop.permute.xlu0 %517
        %519 = vrot.lane.b32.xlu0 %v203, 3
        %v520 = vpop.permute.xlu0 %519
        %521 = vrot.lane.b32.xlu0 %v204, 3
        %v522 = vpop.permute.xlu0 %521
        %523 = vrot.lane.b32.xlu0 %v205, 3
        %v524 = vpop.permute.xlu0 %523
        %525 = vrot.lane.b32.xlu0 %v206, 3
        %v526 = vpop.permute.xlu0 %525
        %527 = vrot.lane.b32.xlu0 %v207, 3
        %v528 = vpop.permute.xlu0 %527
        %561 = vrot.lane.b32.xlu0 %v208, 9
        %v562 = vpop.permute.xlu0 %561
        %563 = vrot.lane.b32.xlu0 %v209, 9
        %v564 = vpop.permute.xlu0 %563
        %565 = vrot.lane.b32.xlu0 %v210, 9
        %v566 = vpop.permute.xlu0 %565
        %567 = vrot.lane.b32.xlu0 %v211, 9
        %v568 = vpop.permute.xlu0 %567
        %569 = vrot.lane.b32.xlu0 %v212, 9
        %v570 = vpop.permute.xlu0 %569
        %571 = vrot.lane.b32.xlu0 %v213, 9
        %v572 = vpop.permute.xlu0 %571
        %573 = vrot.lane.b32.xlu0 %v214, 9
        %v574 = vpop.permute.xlu0 %573
        %575 = vrot.lane.b32.xlu0 %v215, 9
        %v576 = vpop.permute.xlu0 %575
        %577 = vrot.lane.b32.xlu0 %v216, 9
        %v578 = vpop.permute.xlu0 %577
        %579 = vrot.lane.b32.xlu0 %v217, 9
        %v580 = vpop.permute.xlu0 %579
        %581 = vrot.lane.b32.xlu0 %v218, 9
        %v582 = vpop.permute.xlu0 %581
        %583 = vrot.lane.b32.xlu0 %v219, 9
        %v584 = vpop.permute.xlu0 %583
        %585 = vrot.lane.b32.xlu0 %v220, 9
        %v586 = vpop.permute.xlu0 %585
        %587 = vrot.lane.b32.xlu0 %v221, 9
        %v588 = vpop.permute.xlu0 %587
        %589 = vrot.lane.b32.xlu0 %v222, 9
        %v590 = vpop.permute.xlu0 %589
        %591 = vrot.lane.b32.xlu0 %v223, 9
        %v592 = vpop.permute.xlu0 %591
        %593 = vrot.lane.b32.xlu0 %v224, 9
        %v594 = vpop.permute.xlu0 %593
        %595 = vrot.lane.b32.xlu0 %v225, 9
        %v596 = vpop.permute.xlu0 %595
        %597 = vrot.lane.b32.xlu0 %v226, 9
        %v598 = vpop.permute.xlu0 %597
        %599 = vrot.lane.b32.xlu0 %v227, 9
        %v600 = vpop.permute.xlu0 %599
        %601 = vrot.lane.b32.xlu0 %v228, 9
        %v602 = vpop.permute.xlu0 %601
        %603 = vrot.lane.b32.xlu0 %v229, 9
        %v604 = vpop.permute.xlu0 %603
        %605 = vrot.lane.b32.xlu0 %v230, 9
        %v606 = vpop.permute.xlu0 %605
        %607 = vrot.lane.b32.xlu0 %v231, 9
        %v608 = vpop.permute.xlu0 %607
        %609 = vrot.lane.b32.xlu0 %v232, 9
        %v610 = vpop.permute.xlu0 %609
        %611 = vrot.lane.b32.xlu0 %v233, 9
        %v612 = vpop.permute.xlu0 %611
        %613 = vrot.lane.b32.xlu0 %v234, 9
        %v614 = vpop.permute.xlu0 %613
        %615 = vrot.lane.b32.xlu0 %v235, 9
        %v616 = vpop.permute.xlu0 %615
        %617 = vrot.lane.b32.xlu0 %v236, 9
        %v618 = vpop.permute.xlu0 %617
        %619 = vrot.lane.b32.xlu0 %v237, 9
        %v620 = vpop.permute.xlu0 %619
        %621 = vrot.lane.b32.xlu0 %v238, 9
        %v622 = vpop.permute.xlu0 %621
        %623 = vrot.lane.b32.xlu0 %v239, 9
        %v624 = vpop.permute.xlu0 %623
        %689 = vrot.lane.b32.xlu0 %v241, 18
        %v690 = vpop.permute.xlu0 %689
        %691 = vrot.lane.b32.xlu0 %v242, 18
        %v692 = vpop.permute.xlu0 %691
        %693 = vrot.lane.b32.xlu0 %v243, 18
        %v694 = vpop.permute.xlu0 %693
        %695 = vrot.lane.b32.xlu0 %v244, 18
        %v696 = vpop.permute.xlu0 %695
        %697 = vrot.lane.b32.xlu0 %v245, 18
        %v698 = vpop.permute.xlu0 %697
        %699 = vrot.lane.b32.xlu0 %v246, 18
        %v700 = vpop.permute.xlu0 %699
        %701 = vrot.lane.b32.xlu0 %v247, 18
        %v702 = vpop.permute.xlu0 %701
        %703 = vrot.lane.b32.xlu0 %v248, 18
        %v704 = vpop.permute.xlu0 %703
        %705 = vrot.lane.b32.xlu0 %v249, 18
        %v706 = vpop.permute.xlu0 %705
        %707 = vrot.lane.b32.xlu0 %v250, 18
        %v708 = vpop.permute.xlu0 %707
        %709 = vrot.lane.b32.xlu0 %v251, 18
        %v710 = vpop.permute.xlu0 %709
        %711 = vrot.lane.b32.xlu0 %v252, 18
        %v712 = vpop.permute.xlu0 %711
        %713 = vrot.lane.b32.xlu0 %v253, 18
        %v714 = vpop.permute.xlu0 %713
        %715 = vrot.lane.b32.xlu0 %v254, 18
        %v716 = vpop.permute.xlu0 %715
        %717 = vrot.lane.b32.xlu0 %v255, 18
        %v718 = vpop.permute.xlu0 %717
        %719 = vrot.lane.b32.xlu0 %v256, 18
        %v720 = vpop.permute.xlu0 %719
        %721 = vrot.lane.b32.xlu0 %v257, 18
        %v722 = vpop.permute.xlu0 %721
        %723 = vrot.lane.b32.xlu0 %v258, 18
        %v724 = vpop.permute.xlu0 %723
        %725 = vrot.lane.b32.xlu0 %v259, 18
        %v726 = vpop.permute.xlu0 %725
        %727 = vrot.lane.b32.xlu0 %v260, 18
        %v728 = vpop.permute.xlu0 %727
        %729 = vrot.lane.b32.xlu0 %v261, 18
        %v730 = vpop.permute.xlu0 %729
        %731 = vrot.lane.b32.xlu0 %v262, 18
        %v732 = vpop.permute.xlu0 %731
        %733 = vrot.lane.b32.xlu0 %v263, 18
        %v734 = vpop.permute.xlu0 %733
        %735 = vrot.lane.b32.xlu0 %v264, 18
        %v736 = vpop.permute.xlu0 %735
        %737 = vrot.lane.b32.xlu0 %v265, 18
        %v738 = vpop.permute.xlu0 %737
        %739 = vrot.lane.b32.xlu0 %v266, 18
        %v740 = vpop.permute.xlu0 %739
        %741 = vrot.lane.b32.xlu0 %v267, 18
        %v742 = vpop.permute.xlu0 %741
        %743 = vrot.lane.b32.xlu0 %v268, 18
        %v744 = vpop.permute.xlu0 %743
        %745 = vrot.lane.b32.xlu0 %v269, 18
        %v746 = vpop.permute.xlu0 %745
        %747 = vrot.lane.b32.xlu0 %v270, 18
        %v748 = vpop.permute.xlu0 %747
        %749 = vrot.lane.b32.xlu0 %v271, 18
        %v750 = vpop.permute.xlu0 %749
        %751 = vrot.lane.b32.xlu0 %v272, 18
        %v752 = vpop.permute.xlu0 %751
        %817 = vrot.lane.b32.xlu0 %v273, 24
        %v818 = vpop.permute.xlu0 %817
        %819 = vrot.lane.b32.xlu0 %v274, 24
        %v820 = vpop.permute.xlu0 %819
        %821 = vrot.lane.b32.xlu0 %v275, 24
        %v822 = vpop.permute.xlu0 %821
        %823 = vrot.lane.b32.xlu0 %v276, 24
        %v824 = vpop.permute.xlu0 %823
        %825 = vrot.lane.b32.xlu0 %v277, 24
        %v826 = vpop.permute.xlu0 %825
        %827 = vrot.lane.b32.xlu0 %v278, 24
        %v828 = vpop.permute.xlu0 %827
        %829 = vrot.lane.b32.xlu0 %v279, 24
        %v830 = vpop.permute.xlu0 %829
        %831 = vrot.lane.b32.xlu0 %v280, 24
        %v832 = vpop.permute.xlu0 %831
        %833 = vrot.lane.b32.xlu0 %v281, 24
        %v834 = vpop.permute.xlu0 %833
        %835 = vrot.lane.b32.xlu0 %v282, 24
        %v836 = vpop.permute.xlu0 %835
        %837 = vrot.lane.b32.xlu0 %v283, 24
        %v838 = vpop.permute.xlu0 %837
        %839 = vrot.lane.b32.xlu0 %v284, 24
        %v840 = vpop.permute.xlu0 %839
        %841 = vrot.lane.b32.xlu0 %v285, 24
        %v842 = vpop.permute.xlu0 %841
        %843 = vrot.lane.b32.xlu0 %v286, 24
        %v844 = vpop.permute.xlu0 %843
        %845 = vrot.lane.b32.xlu0 %v287, 24
        %v846 = vpop.permute.xlu0 %845
        %847 = vrot.lane.b32.xlu0 %v288, 24
        %v848 = vpop.permute.xlu0 %847
        %849 = vrot.lane.b32.xlu0 %v289, 24
        %v850 = vpop.permute.xlu0 %849
        %851 = vrot.lane.b32.xlu0 %v290, 24
        %v852 = vpop.permute.xlu0 %851
        %853 = vrot.lane.b32.xlu0 %v291, 24
        %v854 = vpop.permute.xlu0 %853
        %855 = vrot.lane.b32.xlu0 %v292, 24
        %v856 = vpop.permute.xlu0 %855
        %857 = vrot.lane.b32.xlu0 %v293, 24
        %v858 = vpop.permute.xlu0 %857
        %859 = vrot.lane.b32.xlu0 %v294, 24
        %v860 = vpop.permute.xlu0 %859
        %861 = vrot.lane.b32.xlu0 %v295, 24
        %v862 = vpop.permute.xlu0 %861
        %863 = vrot.lane.b32.xlu0 %v296, 24
        %v864 = vpop.permute.xlu0 %863
        %865 = vrot.lane.b32.xlu0 %v297, 24
        %v866 = vpop.permute.xlu0 %865
        %867 = vrot.lane.b32.xlu0 %v298, 24
        %v868 = vpop.permute.xlu0 %867
        %869 = vrot.lane.b32.xlu0 %v299, 24
        %v870 = vpop.permute.xlu0 %869
        %871 = vrot.lane.b32.xlu0 %v300, 24
        %v872 = vpop.permute.xlu0 %871
        %873 = vrot.lane.b32.xlu0 %v301, 24
        %v874 = vpop.permute.xlu0 %873
        %875 = vrot.lane.b32.xlu0 %v302, 24
        %v876 = vpop.permute.xlu0 %875
        %877 = vrot.lane.b32.xlu0 %v303, 24
        %v878 = vpop.permute.xlu0 %877
        %879 = vrot.lane.b32.xlu0 %v304, 24
        %v880 = vpop.permute.xlu0 %879
        %vm913 = vcmask 48128
        %v914 = vsel %vm913, %v176, %v338
        %v915 = vsel %vm913, %v177, %v340
        %v916 = vsel %vm913, %v178, %v342
        %v917 = vsel %vm913, %v179, %v344
        %v918 = vsel %vm913, %v180, %v346
        %v919 = vsel %vm913, %v181, %v348
        %v920 = vsel %vm913, %v182, %v350
        %v921 = vsel %vm913, %v183, %v352
        %v922 = vsel %vm913, %v184, %v354
        %v923 = vsel %vm913, %v185, %v356
        %v924 = vsel %vm913, %v186, %v358
        %v925 = vsel %vm913, %v187, %v360
        %v926 = vsel %vm913, %v188, %v362
        %v927 = vsel %vm913, %v189, %v364
        %v928 = vsel %vm913, %v190, %v366
        %v929 = vsel %vm913, %v191, %v368
        %v930 = vsel %vm913, %v192, %v370
        %v931 = vsel %vm913, %v193, %v372
        %v932 = vsel %vm913, %v194, %v374
        %v933 = vsel %vm913, %v195, %v376
        %v934 = vsel %vm913, %v196, %v378
        %v935 = vsel %vm913, %v197, %v380
        %v936 = vsel %vm913, %v198, %v382
        %v937 = vsel %vm913, %v199, %v384
        %v938 = vsel %vm913, %v200, %v386
        %v939 = vsel %vm913, %v201, %v388
        %v940 = vsel %vm913, %v202, %v390
        %v941 = vsel %vm913, %v203, %v392
        %v942 = vsel %vm913, %v204, %v394
        %v943 = vsel %vm913, %v205, %v396
        %v944 = vsel %vm913, %v206, %v398
        %v945 = vsel %vm913, %v207, %v400
        %vm946 = vcmask 72704
        %v947 = vsel %vm946, %v914, %v466
        %v948 = vsel %vm946, %v915, %v468
        %v949 = vsel %vm946, %v916, %v470
        %v950 = vsel %vm946, %v917, %v472
        %v951 = vsel %vm946, %v918, %v474
        %v952 = vsel %vm946, %v919, %v476
        %v953 = vsel %vm946, %v920, %v478
        %v954 = vsel %vm946, %v921, %v480
        %v955 = vsel %vm946, %v922, %v482
        %v956 = vsel %vm946, %v923, %v484
        %v957 = vsel %vm946, %v924, %v486
        %v958 = vsel %vm946, %v925, %v488
        %v959 = vsel %vm946, %v926, %v490
        %v960 = vsel %vm946, %v927, %v492
        %v961 = vsel %vm946, %v928, %v494
        %v962 = vsel %vm946, %v929, %v496
        %v963 = vsel %vm946, %v930, %v498
        %v964 = vsel %vm946, %v931, %v500
        %v965 = vsel %vm946, %v932, %v502
        %v966 = vsel %vm946, %v933, %v504
        %v967 = vsel %vm946, %v934, %v506
        %v968 = vsel %vm946, %v935, %v508
        %v969 = vsel %vm946, %v936, %v510
        %v970 = vsel %vm946, %v937, %v512
        %v971 = vsel %vm946, %v938, %v514
        %v972 = vsel %vm946, %v939, %v516
        %v973 = vsel %vm946, %v940, %v518
        %v974 = vsel %vm946, %v941, %v520
        %v975 = vsel %vm946, %v942, %v522
        %v976 = vsel %vm946, %v943, %v524
        %v977 = vsel %vm946, %v944, %v526
        %v978 = vsel %vm946, %v945, %v528
        %vm979 = vcmask 97280
        %v980 = vsel %vm979, %v947, %v466
        %v981 = vsel %vm979, %v948, %v468
        %v982 = vsel %vm979, %v949, %v470
        %v983 = vsel %vm979, %v950, %v472
        %v984 = vsel %vm979, %v951, %v474
        %v985 = vsel %vm979, %v952, %v476
        %v986 = vsel %vm979, %v953, %v478
        %v987 = vsel %vm979, %v954, %v480
        %v988 = vsel %vm979, %v955, %v482
        %v989 = vsel %vm979, %v956, %v484
        %v990 = vsel %vm979, %v957, %v486
        %v991 = vsel %vm979, %v958, %v488
        %v992 = vsel %vm979, %v959, %v490
        %v993 = vsel %vm979, %v960, %v492
        %v994 = vsel %vm979, %v961, %v494
        %v995 = vsel %vm979, %v962, %v496
        %v996 = vsel %vm979, %v963, %v498
        %v997 = vsel %vm979, %v964, %v500
        %v998 = vsel %vm979, %v965, %v502
        %v999 = vsel %vm979, %v966, %v504
        %v1000 = vsel %vm979, %v967, %v506
        %v1001 = vsel %vm979, %v968, %v508
        %v1002 = vsel %vm979, %v969, %v510
        %v1003 = vsel %vm979, %v970, %v512
        %v1004 = vsel %vm979, %v971, %v514
        %v1005 = vsel %vm979, %v972, %v516
        %v1006 = vsel %vm979, %v973, %v518
        %v1007 = vsel %vm979, %v974, %v520
        %v1008 = vsel %vm979, %v975, %v522
        %v1009 = vsel %vm979, %v976, %v524
        %v1010 = vsel %vm979, %v977, %v526
        %v1011 = vsel %vm979, %v978, %v528
        %vm1012 = vcmask 121856
        %v1013 = vsel %vm1012, %v980, %v562
        %v1014 = vsel %vm1012, %v981, %v564
        %v1015 = vsel %vm1012, %v982, %v566
        %v1016 = vsel %vm1012, %v983, %v568
        %v1017 = vsel %vm1012, %v984, %v570
        %v1018 = vsel %vm1012, %v985, %v572
        %v1019 = vsel %vm1012, %v986, %v574
        %v1020 = vsel %vm1012, %v987, %v576
        %v1021 = vsel %vm1012, %v988, %v578
        %v1022 = vsel %vm1012, %v989, %v580
        %v1023 = vsel %vm1012, %v990, %v582
        %v1024 = vsel %vm1012, %v991, %v584
        %v1025 = vsel %vm1012, %v992, %v586
        %v1026 = vsel %vm1012, %v993, %v588
        %v1027 = vsel %vm1012, %v994, %v590
        %v1028 = vsel %vm1012, %v995, %v592
        %v1029 = vsel %vm1012, %v996, %v594
        %v1030 = vsel %vm1012, %v997, %v596
        %v1031 = vsel %vm1012, %v998, %v598
        %v1032 = vsel %vm1012, %v999, %v600
        %v1033 = vsel %vm1012, %v1000, %v602
        %v1034 = vsel %vm1012, %v1001, %v604
        %v1035 = vsel %vm1012, %v1002, %v606
        %v1036 = vsel %vm1012, %v1003, %v608
        %v1037 = vsel %vm1012, %v1004, %v610
        %v1038 = vsel %vm1012, %v1005, %v612
        %v1039 = vsel %vm1012, %v1006, %v614
        %v1040 = vsel %vm1012, %v1007, %v616
        %v1041 = vsel %vm1012, %v1008, %v618
        %v1042 = vsel %vm1012, %v1009, %v620
        %v1043 = vsel %vm1012, %v1010, %v622
        %v1044 = vsel %vm1012, %v1011, %v624
        %vm1045 = vcmask 146432
        %v1046 = vsel %vm1045, %v1013, %v690
        %v1047 = vsel %vm1045, %v1014, %v692
        %v1048 = vsel %vm1045, %v1015, %v694
        %v1049 = vsel %vm1045, %v1016, %v696
        %v1050 = vsel %vm1045, %v1017, %v698
        %v1051 = vsel %vm1045, %v1018, %v700
        %v1052 = vsel %vm1045, %v1019, %v702
        %v1053 = vsel %vm1045, %v1020, %v704
        %v1054 = vsel %vm1045, %v1021, %v706
        %v1055 = vsel %vm1045, %v1022, %v708
        %v1056 = vsel %vm1045, %v1023, %v710
        %v1057 = vsel %vm1045, %v1024, %v712
        %v1058 = vsel %vm1045, %v1025, %v714
        %v1059 = vsel %vm1045, %v1026, %v716
        %v1060 = vsel %vm1045, %v1027, %v718
        %v1061 = vsel %vm1045, %v1028, %v720
        %v1062 = vsel %vm1045, %v1029, %v722
        %v1063 = vsel %vm1045, %v1030, %v724
        %v1064 = vsel %vm1045, %v1031, %v726
        %v1065 = vsel %vm1045, %v1032, %v728
        %v1066 = vsel %vm1045, %v1033, %v730
        %v1067 = vsel %vm1045, %v1034, %v732
        %v1068 = vsel %vm1045, %v1035, %v734
        %v1069 = vsel %vm1045, %v1036, %v736
        %v1070 = vsel %vm1045, %v1037, %v738
        %v1071 = vsel %vm1045, %v1038, %v740
        %v1072 = vsel %vm1045, %v1039, %v742
        %v1073 = vsel %vm1045, %v1040, %v744
        %v1074 = vsel %vm1045, %v1041, %v746
        %v1075 = vsel %vm1045, %v1042, %v748
        %v1076 = vsel %vm1045, %v1043, %v750
        %v1077 = vsel %vm1045, %v1044, %v752
        %vm1078 = vcmask 171008
        %v1079 = vsel %vm1078, %v1046, %v690
        %v1080 = vsel %vm1078, %v1047, %v692
        %v1081 = vsel %vm1078, %v1048, %v694
        %v1082 = vsel %vm1078, %v1049, %v696
        %v1083 = vsel %vm1078, %v1050, %v698
        %v1084 = vsel %vm1078, %v1051, %v700
        %v1085 = vsel %vm1078, %v1052, %v702
        %v1086 = vsel %vm1078, %v1053, %v704
        %v1087 = vsel %vm1078, %v1054, %v706
        %v1088 = vsel %vm1078, %v1055, %v708
        %v1089 = vsel %vm1078, %v1056, %v710
        %v1090 = vsel %vm1078, %v1057, %v712
        %v1091 = vsel %vm1078, %v1058, %v714
        %v1092 = vsel %vm1078, %v1059, %v716
        %v1093 = vsel %vm1078, %v1060, %v718
        %v1094 = vsel %vm1078, %v1061, %v720
        %v1095 = vsel %vm1078, %v1062, %v722
        %v1096 = vsel %vm1078, %v1063, %v724
        %v1097 = vsel %vm1078, %v1064, %v726
        %v1098 = vsel %vm1078, %v1065, %v728
        %v1099 = vsel %vm1078, %v1066, %v730
        %v1100 = vsel %vm1078, %v1067, %v732
        %v1101 = vsel %vm1078, %v1068, %v734
        %v1102 = vsel %vm1078, %v1069, %v736
        %v1103 = vsel %vm1078, %v1070, %v738
        %v1104 = vsel %vm1078, %v1071, %v740
        %v1105 = vsel %vm1078, %v1072, %v742
        %v1106 = vsel %vm1078, %v1073, %v744
        %v1107 = vsel %vm1078, %v1074, %v746
        %v1108 = vsel %vm1078, %v1075, %v748
        %v1109 = vsel %vm1078, %v1076, %v750
        %v1110 = vsel %vm1078, %v1077, %v752
        %vm1111 = vcmask 195584
        %v1112 = vsel %vm1111, %v1079, %v818
        %v1113 = vsel %vm1111, %v1080, %v820
        %v1114 = vsel %vm1111, %v1081, %v822
        %v1115 = vsel %vm1111, %v1082, %v824
        %v1116 = vsel %vm1111, %v1083, %v826
        %v1117 = vsel %vm1111, %v1084, %v828
        %v1118 = vsel %vm1111, %v1085, %v830
        %v1119 = vsel %vm1111, %v1086, %v832
        %v1120 = vsel %vm1111, %v1087, %v834
        %v1121 = vsel %vm1111, %v1088, %v836
        %v1122 = vsel %vm1111, %v1089, %v838
        %v1123 = vsel %vm1111, %v1090, %v840
        %v1124 = vsel %vm1111, %v1091, %v842
        %v1125 = vsel %vm1111, %v1092, %v844
        %v1126 = vsel %vm1111, %v1093, %v846
        %v1127 = vsel %vm1111, %v1094, %v848
        %v1128 = vsel %vm1111, %v1095, %v850
        %v1129 = vsel %vm1111, %v1096, %v852
        %v1130 = vsel %vm1111, %v1097, %v854
        %v1131 = vsel %vm1111, %v1098, %v856
        %v1132 = vsel %vm1111, %v1099, %v858
        %v1133 = vsel %vm1111, %v1100, %v860
        %v1134 = vsel %vm1111, %v1101, %v862
        %v1135 = vsel %vm1111, %v1102, %v864
        %v1136 = vsel %vm1111, %v1103, %v866
        %v1137 = vsel %vm1111, %v1104, %v868
        %v1138 = vsel %vm1111, %v1105, %v870
        %v1139 = vsel %vm1111, %v1106, %v872
        %v1140 = vsel %vm1111, %v1107, %v874
        %v1141 = vsel %vm1111, %v1108, %v876
        %v1142 = vsel %vm1111, %v1109, %v878
        %v1143 = vsel %vm1111, %v1110, %v880
        %v1144 = vpack.c.bf16 %v1113, %v1112
        %v1145 = vpack.c.bf16 %v1115, %v1114
        %v1146 = vpack.c.bf16 %v1117, %v1116
        %v1147 = vpack.c.bf16 %v1119, %v1118
        %v1148 = vpack.c.bf16 %v1121, %v1120
        %v1149 = vpack.c.bf16 %v1123, %v1122
        %v1150 = vpack.c.bf16 %v1125, %v1124
        %v1151 = vpack.c.bf16 %v1127, %v1126
        %v1152 = vpack.c.bf16 %v1129, %v1128
        %v1153 = vpack.c.bf16 %v1131, %v1130
        %v1154 = vpack.c.bf16 %v1133, %v1132
        %v1155 = vpack.c.bf16 %v1135, %v1134
        %v1156 = vpack.c.bf16 %v1137, %v1136
        %v1157 = vpack.c.bf16 %v1139, %v1138
        %v1158 = vpack.c.bf16 %v1141, %v1140
        %v1159 = vpack.c.bf16 %v1143, %v1142
        %v1160 = vld [vmem:[%s1] sm:$0xff]
        %v1161 = vld [vmem:[%s1 + $0x8] sm:$0xff]
        %v1162 = vld [vmem:[%s1 + $0x10] sm:$0xff]
        %v1163 = vld [vmem:[%s1 + $0x18] sm:$0x33]
        %v1164 = vld [vmem:[%s2] sm:$0x3]
        %v1166 = vperm.slane %v1164, 0
        %v1167 = vperm.slane %v1164, 1
        %v1174 = vunpack.c.l.b16 %v1160
        %v1175 = vunpack.c.h.b16 %v1160
        %v1176 = vunpack.c.l.b16 %v1161
        %v1177 = vunpack.c.h.b16 %v1161
        %v1178 = vunpack.c.l.b16 %v1162
        %v1179 = vunpack.c.h.b16 %v1162
        %v1180 = vunpack.c.l.b16 %v1163
        %v1181 = vunpack.c.h.b16 %v1163
        %v1182 = vpack.c.b16 %v1176, %v1174
        %v1183 = vpack.c.b16 %v1177, %v1175
        %v1184 = vpack.c.b16 %v1180, %v1178
        %v1185 = vpack.c.b16 %v1181, %v1179
        %vm1188 = vcmask 220160
        %v1190 = vsel %vm1188, %v1144, 0
        %v1193 = vsel %vm1188, %v1145, 0
        %v1196 = vsel %vm1188, %v1146, 0
        %v1199 = vsel %vm1188, %v1147, 0
        %v1202 = vsel %vm1188, %v1148, 0
        %v1205 = vsel %vm1188, %v1149, 0
        %v1208 = vsel %vm1188, %v1150, 0
        %v1211 = vsel %vm1188, %v1151, 0
        %v1214 = vsel %vm1188, %v1152, 0
        %v1217 = vsel %vm1188, %v1153, 0
        %v1220 = vsel %vm1188, %v1154, 0
        %v1223 = vsel %vm1188, %v1155, 0
        %v1226 = vsel %vm1188, %v1156, 0
        %v1229 = vsel %vm1188, %v1157, 0
        %v1232 = vsel %vm1188, %v1158, 0
        %v1235 = vsel %vm1188, %v1159, 0
        %vm1237 = vcmask 1044480
        %vm1238 = vcmask 1045504
        %v1239 = vsel %vm1237, 4294967295, 65535
        %v1240 = vsel %vm1238, %v1239, 0
        %v1242 = vand.u32 %v1184, %v1240
        %v1245 = vand.u32 %v1185, %v1240
        %1247 = vmatpush.bf16.msra.mxu0 0
        %1248 = vmatpush.bf16.msra.mxu0 0
        %1249 = vmatpush.bf16.msra.mxu0 0
        %1250 = vmatpush.bf16.msra.mxu0 0
        %1251 = vmatpush.bf16.msra.mxu0 0
        %1252 = vmatpush.bf16.msra.mxu0 0
        %1253 = vmatpush.bf16.msra.mxu0 %v1242
        %1254 = vmatpush.bf16.msra.mxu0 %v1182
        %1255 = vmatmul.bf16.gmra.mxu0 %v1190
        %v1256 = vpop.f32.mrf.mxu0
        %v1257 = vadd.f32 %v1166, %v1256
        %v1258 = vpop.f32.mrf.mxu0
        %v1259 = vadd.f32 %v1166, %v1258
        %1260 = vmatmul.bf16.gmra.mxu0 %v1193
        %v1261 = vpop.f32.mrf.mxu0
        %v1262 = vadd.f32 %v1166, %v1261
        %v1263 = vpop.f32.mrf.mxu0
        %v1264 = vadd.f32 %v1166, %v1263
        %1265 = vmatmul.bf16.gmra.mxu0 %v1196
        %v1266 = vpop.f32.mrf.mxu0
        %v1267 = vadd.f32 %v1166, %v1266
        %v1268 = vpop.f32.mrf.mxu0
        %v1269 = vadd.f32 %v1166, %v1268
        %1270 = vmatmul.bf16.gmra.mxu0 %v1199
        %v1271 = vpop.f32.mrf.mxu0
        %v1272 = vadd.f32 %v1166, %v1271
        %v1273 = vpop.f32.mrf.mxu0
        %v1274 = vadd.f32 %v1166, %v1273
        %1275 = vmatmul.bf16.gmra.mxu0 %v1202
        %v1276 = vpop.f32.mrf.mxu0
        %v1277 = vadd.f32 %v1166, %v1276
        %v1278 = vpop.f32.mrf.mxu0
        %v1279 = vadd.f32 %v1166, %v1278
        %1280 = vmatmul.bf16.gmra.mxu0 %v1205
        %v1281 = vpop.f32.mrf.mxu0
        %v1282 = vadd.f32 %v1166, %v1281
        %v1283 = vpop.f32.mrf.mxu0
        %v1284 = vadd.f32 %v1166, %v1283
        %1285 = vmatmul.bf16.gmra.mxu0 %v1208
        %v1286 = vpop.f32.mrf.mxu0
        %v1287 = vadd.f32 %v1166, %v1286
        %v1288 = vpop.f32.mrf.mxu0
        %v1289 = vadd.f32 %v1166, %v1288
        %1290 = vmatmul.bf16.gmra.mxu0 %v1211
        %v1291 = vpop.f32.mrf.mxu0
        %v1292 = vadd.f32 %v1166, %v1291
        %v1293 = vpop.f32.mrf.mxu0
        %v1294 = vadd.f32 %v1166, %v1293
        %1295 = vmatmul.bf16.gmra.mxu0 %v1214
        %v1296 = vpop.f32.mrf.mxu0
        %v1297 = vadd.f32 %v1166, %v1296
        %v1298 = vpop.f32.mrf.mxu0
        %v1299 = vadd.f32 %v1166, %v1298
        %1300 = vmatmul.bf16.gmra.mxu0 %v1217
        %v1301 = vpop.f32.mrf.mxu0
        %v1302 = vadd.f32 %v1166, %v1301
        %v1303 = vpop.f32.mrf.mxu0
        %v1304 = vadd.f32 %v1166, %v1303
        %1305 = vmatmul.bf16.gmra.mxu0 %v1220
        %v1306 = vpop.f32.mrf.mxu0
        %v1307 = vadd.f32 %v1166, %v1306
        %v1308 = vpop.f32.mrf.mxu0
        %v1309 = vadd.f32 %v1166, %v1308
        %1310 = vmatmul.bf16.gmra.mxu0 %v1223
        %v1311 = vpop.f32.mrf.mxu0
        %v1312 = vadd.f32 %v1166, %v1311
        %v1313 = vpop.f32.mrf.mxu0
        %v1314 = vadd.f32 %v1166, %v1313
        %1315 = vmatmul.bf16.gmra.mxu0 %v1226
        %v1316 = vpop.f32.mrf.mxu0
        %v1317 = vadd.f32 %v1166, %v1316
        %v1318 = vpop.f32.mrf.mxu0
        %v1319 = vadd.f32 %v1166, %v1318
        %1320 = vmatmul.bf16.gmra.mxu0 %v1229
        %v1321 = vpop.f32.mrf.mxu0
        %v1322 = vadd.f32 %v1166, %v1321
        %v1323 = vpop.f32.mrf.mxu0
        %v1324 = vadd.f32 %v1166, %v1323
        %1325 = vmatmul.bf16.gmra.mxu0 %v1232
        %v1326 = vpop.f32.mrf.mxu0
        %v1327 = vadd.f32 %v1166, %v1326
        %v1328 = vpop.f32.mrf.mxu0
        %v1329 = vadd.f32 %v1166, %v1328
        %1330 = vmatmul.bf16.gmra.mxu0 %v1235
        %v1331 = vpop.f32.mrf.mxu0
        %v1332 = vadd.f32 %v1166, %v1331
        %v1333 = vpop.f32.mrf.mxu0
        %v1334 = vadd.f32 %v1166, %v1333
        %1335 = vdwg.mxu0
        %1336 = vmatpush.bf16.msra.mxu0 0
        %1337 = vmatpush.bf16.msra.mxu0 0
        %1338 = vmatpush.bf16.msra.mxu0 0
        %1339 = vmatpush.bf16.msra.mxu0 0
        %1340 = vmatpush.bf16.msra.mxu0 0
        %1341 = vmatpush.bf16.msra.mxu0 0
        %1342 = vmatpush.bf16.msra.mxu0 %v1245
        %1343 = vmatpush.bf16.msra.mxu0 %v1183
        %1344 = vmatmul.bf16.gmra.mxu0 %v1190
        %v1345 = vpop.f32.mrf.mxu0
        %v1346 = vadd.f32 %v1167, %v1345
        %v1347 = vpop.f32.mrf.mxu0
        %v1348 = vadd.f32 %v1167, %v1347
        %1349 = vmatmul.bf16.gmra.mxu0 %v1193
        %v1350 = vpop.f32.mrf.mxu0
        %v1351 = vadd.f32 %v1167, %v1350
        %v1352 = vpop.f32.mrf.mxu0
        %v1353 = vadd.f32 %v1167, %v1352
        %1354 = vmatmul.bf16.gmra.mxu0 %v1196
        %v1355 = vpop.f32.mrf.mxu0
        %v1356 = vadd.f32 %v1167, %v1355
        %v1357 = vpop.f32.mrf.mxu0
        %v1358 = vadd.f32 %v1167, %v1357
        %1359 = vmatmul.bf16.gmra.mxu0 %v1199
        %v1360 = vpop.f32.mrf.mxu0
        %v1361 = vadd.f32 %v1167, %v1360
        %v1362 = vpop.f32.mrf.mxu0
        %v1363 = vadd.f32 %v1167, %v1362
        %1364 = vmatmul.bf16.gmra.mxu0 %v1202
        %v1365 = vpop.f32.mrf.mxu0
        %v1366 = vadd.f32 %v1167, %v1365
        %v1367 = vpop.f32.mrf.mxu0
        %v1368 = vadd.f32 %v1167, %v1367
        %1369 = vmatmul.bf16.gmra.mxu0 %v1205
        %v1370 = vpop.f32.mrf.mxu0
        %v1371 = vadd.f32 %v1167, %v1370
        %v1372 = vpop.f32.mrf.mxu0
        %v1373 = vadd.f32 %v1167, %v1372
        %1374 = vmatmul.bf16.gmra.mxu0 %v1208
        %v1375 = vpop.f32.mrf.mxu0
        %v1376 = vadd.f32 %v1167, %v1375
        %v1377 = vpop.f32.mrf.mxu0
        %v1378 = vadd.f32 %v1167, %v1377
        %1379 = vmatmul.bf16.gmra.mxu0 %v1211
        %v1380 = vpop.f32.mrf.mxu0
        %v1381 = vadd.f32 %v1167, %v1380
        %v1382 = vpop.f32.mrf.mxu0
        %v1383 = vadd.f32 %v1167, %v1382
        %1384 = vmatmul.bf16.gmra.mxu0 %v1214
        %v1385 = vpop.f32.mrf.mxu0
        %v1386 = vadd.f32 %v1167, %v1385
        %v1387 = vpop.f32.mrf.mxu0
        %v1388 = vadd.f32 %v1167, %v1387
        %1389 = vmatmul.bf16.gmra.mxu0 %v1217
        %v1390 = vpop.f32.mrf.mxu0
        %v1391 = vadd.f32 %v1167, %v1390
        %v1392 = vpop.f32.mrf.mxu0
        %v1393 = vadd.f32 %v1167, %v1392
        %1394 = vmatmul.bf16.gmra.mxu0 %v1220
        %v1395 = vpop.f32.mrf.mxu0
        %v1396 = vadd.f32 %v1167, %v1395
        %v1397 = vpop.f32.mrf.mxu0
        %v1398 = vadd.f32 %v1167, %v1397
        %1399 = vmatmul.bf16.gmra.mxu0 %v1223
        %v1400 = vpop.f32.mrf.mxu0
        %v1401 = vadd.f32 %v1167, %v1400
        %v1402 = vpop.f32.mrf.mxu0
        %v1403 = vadd.f32 %v1167, %v1402
        %1404 = vmatmul.bf16.gmra.mxu0 %v1226
        %v1405 = vpop.f32.mrf.mxu0
        %v1406 = vadd.f32 %v1167, %v1405
        %v1407 = vpop.f32.mrf.mxu0
        %v1408 = vadd.f32 %v1167, %v1407
        %1409 = vmatmul.bf16.gmra.mxu0 %v1229
        %v1410 = vpop.f32.mrf.mxu0
        %v1411 = vadd.f32 %v1167, %v1410
        %v1412 = vpop.f32.mrf.mxu0
        %v1413 = vadd.f32 %v1167, %v1412
        %1414 = vmatmul.bf16.gmra.mxu0 %v1232
        %v1415 = vpop.f32.mrf.mxu0
        %v1416 = vadd.f32 %v1167, %v1415
        %v1417 = vpop.f32.mrf.mxu0
        %v1418 = vadd.f32 %v1167, %v1417
        %1419 = vmatmul.bf16.gmra.mxu0 %v1235
        %v1420 = vpop.f32.mrf.mxu0
        %v1421 = vadd.f32 %v1167, %v1420
        %v1422 = vpop.f32.mrf.mxu0
        %v1423 = vadd.f32 %v1167, %v1422
        %1424 = vdwg.mxu0
        %vm1425 = vcmp.ge.f32.partialorder %v1257, 0.0
        %vm1426 = vcmp.ge.f32.partialorder %v1346, 0.0
        %vm1427 = vcmp.ge.f32.partialorder %v1259, 0.0
        %vm1428 = vcmp.ge.f32.partialorder %v1348, 0.0
        %vm1429 = vcmp.ge.f32.partialorder %v1262, 0.0
        %vm1430 = vcmp.ge.f32.partialorder %v1351, 0.0
        %vm1431 = vcmp.ge.f32.partialorder %v1264, 0.0
        %vm1432 = vcmp.ge.f32.partialorder %v1353, 0.0
        %vm1433 = vcmp.ge.f32.partialorder %v1267, 0.0
        %vm1434 = vcmp.ge.f32.partialorder %v1356, 0.0
        %vm1435 = vcmp.ge.f32.partialorder %v1269, 0.0
        %vm1436 = vcmp.ge.f32.partialorder %v1358, 0.0
        %vm1437 = vcmp.ge.f32.partialorder %v1272, 0.0
        %vm1438 = vcmp.ge.f32.partialorder %v1361, 0.0
        %vm1439 = vcmp.ge.f32.partialorder %v1274, 0.0
        %vm1440 = vcmp.ge.f32.partialorder %v1363, 0.0
        %vm1441 = vcmp.ge.f32.partialorder %v1277, 0.0
        %vm1442 = vcmp.ge.f32.partialorder %v1366, 0.0
        %vm1443 = vcmp.ge.f32.partialorder %v1279, 0.0
        %vm1444 = vcmp.ge.f32.partialorder %v1368, 0.0
        %vm1445 = vcmp.ge.f32.partialorder %v1282, 0.0
        %vm1446 = vcmp.ge.f32.partialorder %v1371, 0.0
        %vm1447 = vcmp.ge.f32.partialorder %v1284, 0.0
        %vm1448 = vcmp.ge.f32.partialorder %v1373, 0.0
        %vm1449 = vcmp.ge.f32.partialorder %v1287, 0.0
        %vm1450 = vcmp.ge.f32.partialorder %v1376, 0.0
        %vm1451 = vcmp.ge.f32.partialorder %v1289, 0.0
        %vm1452 = vcmp.ge.f32.partialorder %v1378, 0.0
        %vm1453 = vcmp.ge.f32.partialorder %v1292, 0.0
        %vm1454 = vcmp.ge.f32.partialorder %v1381, 0.0
        %vm1455 = vcmp.ge.f32.partialorder %v1294, 0.0
        %vm1456 = vcmp.ge.f32.partialorder %v1383, 0.0
        %vm1457 = vcmp.ge.f32.partialorder %v1297, 0.0
        %vm1458 = vcmp.ge.f32.partialorder %v1386, 0.0
        %vm1459 = vcmp.ge.f32.partialorder %v1299, 0.0
        %vm1460 = vcmp.ge.f32.partialorder %v1388, 0.0
        %vm1461 = vcmp.ge.f32.partialorder %v1302, 0.0
        %vm1462 = vcmp.ge.f32.partialorder %v1391, 0.0
        %vm1463 = vcmp.ge.f32.partialorder %v1304, 0.0
        %vm1464 = vcmp.ge.f32.partialorder %v1393, 0.0
        %vm1465 = vcmp.ge.f32.partialorder %v1307, 0.0
        %vm1466 = vcmp.ge.f32.partialorder %v1396, 0.0
        %vm1467 = vcmp.ge.f32.partialorder %v1309, 0.0
        %vm1468 = vcmp.ge.f32.partialorder %v1398, 0.0
        %vm1469 = vcmp.ge.f32.partialorder %v1312, 0.0
        %vm1470 = vcmp.ge.f32.partialorder %v1401, 0.0
        %vm1471 = vcmp.ge.f32.partialorder %v1314, 0.0
        %vm1472 = vcmp.ge.f32.partialorder %v1403, 0.0
        %vm1473 = vcmp.ge.f32.partialorder %v1317, 0.0
        %vm1474 = vcmp.ge.f32.partialorder %v1406, 0.0
        %vm1475 = vcmp.ge.f32.partialorder %v1319, 0.0
        %vm1476 = vcmp.ge.f32.partialorder %v1408, 0.0
        %vm1477 = vcmp.ge.f32.partialorder %v1322, 0.0
        %vm1478 = vcmp.ge.f32.partialorder %v1411, 0.0
        %vm1479 = vcmp.ge.f32.partialorder %v1324, 0.0
        %vm1480 = vcmp.ge.f32.partialorder %v1413, 0.0
        %vm1481 = vcmp.ge.f32.partialorder %v1327, 0.0
        %vm1482 = vcmp.ge.f32.partialorder %v1416, 0.0
        %vm1483 = vcmp.ge.f32.partialorder %v1329, 0.0
        %vm1484 = vcmp.ge.f32.partialorder %v1418, 0.0
        %vm1485 = vcmp.ge.f32.partialorder %v1332, 0.0
        %vm1486 = vcmp.ge.f32.partialorder %v1421, 0.0
        %vm1487 = vcmp.ge.f32.partialorder %v1334, 0.0
        %vm1488 = vcmp.ge.f32.partialorder %v1423, 0.0
        %v1489 = vmul.f32 %v1257, 0.1
        %v1490 = vmul.f32 %v1346, 0.1
        %v1491 = vmul.f32 %v1259, 0.1
        %v1492 = vmul.f32 %v1348, 0.1
        %v1493 = vmul.f32 %v1262, 0.1
        %v1494 = vmul.f32 %v1351, 0.1
        %v1495 = vmul.f32 %v1264, 0.1
        %v1496 = vmul.f32 %v1353, 0.1
        %v1497 = vmul.f32 %v1267, 0.1
        %v1498 = vmul.f32 %v1356, 0.1
        %v1499 = vmul.f32 %v1269, 0.1
        %v1500 = vmul.f32 %v1358, 0.1
        %v1501 = vmul.f32 %v1272, 0.1
        %v1502 = vmul.f32 %v1361, 0.1
        %v1503 = vmul.f32 %v1274, 0.1
        %v1504 = vmul.f32 %v1363, 0.1
        %v1505 = vmul.f32 %v1277, 0.1
        %v1506 = vmul.f32 %v1366, 0.1
        %v1507 = vmul.f32 %v1279, 0.1
        %v1508 = vmul.f32 %v1368, 0.1
        %v1509 = vmul.f32 %v1282, 0.1
        %v1510 = vmul.f32 %v1371, 0.1
        %v1511 = vmul.f32 %v1284, 0.1
        %v1512 = vmul.f32 %v1373, 0.1
        %v1513 = vmul.f32 %v1287, 0.1
        %v1514 = vmul.f32 %v1376, 0.1
        %v1515 = vmul.f32 %v1289, 0.1
        %v1516 = vmul.f32 %v1378, 0.1
        %v1517 = vmul.f32 %v1292, 0.1
        %v1518 = vmul.f32 %v1381, 0.1
        %v1519 = vmul.f32 %v1294, 0.1
        %v1520 = vmul.f32 %v1383, 0.1
        %v1521 = vmul.f32 %v1297, 0.1
        %v1522 = vmul.f32 %v1386, 0.1
        %v1523 = vmul.f32 %v1299, 0.1
        %v1524 = vmul.f32 %v1388, 0.1
        %v1525 = vmul.f32 %v1302, 0.1
        %v1526 = vmul.f32 %v1391, 0.1
        %v1527 = vmul.f32 %v1304, 0.1
        %v1528 = vmul.f32 %v1393, 0.1
        %v1529 = vmul.f32 %v1307, 0.1
        %v1530 = vmul.f32 %v1396, 0.1
        %v1531 = vmul.f32 %v1309, 0.1
        %v1532 = vmul.f32 %v1398, 0.1
        %v1533 = vmul.f32 %v1312, 0.1
        %v1534 = vmul.f32 %v1401, 0.1
        %v1535 = vmul.f32 %v1314, 0.1
        %v1536 = vmul.f32 %v1403, 0.1
        %v1537 = vmul.f32 %v1317, 0.1
        %v1538 = vmul.f32 %v1406, 0.1
        %v1539 = vmul.f32 %v1319, 0.1
        %v1540 = vmul.f32 %v1408, 0.1
        %v1541 = vmul.f32 %v1322, 0.1
        %v1542 = vmul.f32 %v1411, 0.1
        %v1543 = vmul.f32 %v1324, 0.1
        %v1544 = vmul.f32 %v1413, 0.1
        %v1545 = vmul.f32 %v1327, 0.1
        %v1546 = vmul.f32 %v1416, 0.1
        %v1547 = vmul.f32 %v1329, 0.1
        %v1548 = vmul.f32 %v1418, 0.1
        %v1549 = vmul.f32 %v1332, 0.1
        %v1550 = vmul.f32 %v1421, 0.1
        %v1551 = vmul.f32 %v1334, 0.1
        %v1552 = vmul.f32 %v1423, 0.1
        %v1553 = vsel %vm1425, %v1257, %v1489
        %v1554 = vsel %vm1426, %v1346, %v1490
        %v1555 = vsel %vm1427, %v1259, %v1491
        %v1556 = vsel %vm1428, %v1348, %v1492
        %v1557 = vsel %vm1429, %v1262, %v1493
        %v1558 = vsel %vm1430, %v1351, %v1494
        %v1559 = vsel %vm1431, %v1264, %v1495
        %v1560 = vsel %vm1432, %v1353, %v1496
        %v1561 = vsel %vm1433, %v1267, %v1497
        %v1562 = vsel %vm1434, %v1356, %v1498
        %v1563 = vsel %vm1435, %v1269, %v1499
        %v1564 = vsel %vm1436, %v1358, %v1500
        %v1565 = vsel %vm1437, %v1272, %v1501
        %v1566 = vsel %vm1438, %v1361, %v1502
        %v1567 = vsel %vm1439, %v1274, %v1503
        %v1568 = vsel %vm1440, %v1363, %v1504
        %v1569 = vsel %vm1441, %v1277, %v1505
        %v1570 = vsel %vm1442, %v1366, %v1506
        %v1571 = vsel %vm1443, %v1279, %v1507
        %v1572 = vsel %vm1444, %v1368, %v1508
        %v1573 = vsel %vm1445, %v1282, %v1509
        %v1574 = vsel %vm1446, %v1371, %v1510
        %v1575 = vsel %vm1447, %v1284, %v1511
        %v1576 = vsel %vm1448, %v1373, %v1512
        %v1577 = vsel %vm1449, %v1287, %v1513
        %v1578 = vsel %vm1450, %v1376, %v1514
        %v1579 = vsel %vm1451, %v1289, %v1515
        %v1580 = vsel %vm1452, %v1378, %v1516
        %v1581 = vsel %vm1453, %v1292, %v1517
        %v1582 = vsel %vm1454, %v1381, %v1518
        %v1583 = vsel %vm1455, %v1294, %v1519
        %v1584 = vsel %vm1456, %v1383, %v1520
        %v1585 = vsel %vm1457, %v1297, %v1521
        %v1586 = vsel %vm1458, %v1386, %v1522
        %v1587 = vsel %vm1459, %v1299, %v1523
        %v1588 = vsel %vm1460, %v1388, %v1524
        %v1589 = vsel %vm1461, %v1302, %v1525
        %v1590 = vsel %vm1462, %v1391, %v1526
        %v1591 = vsel %vm1463, %v1304, %v1527
        %v1592 = vsel %vm1464, %v1393, %v1528
        %v1593 = vsel %vm1465, %v1307, %v1529
        %v1594 = vsel %vm1466, %v1396, %v1530
        %v1595 = vsel %vm1467, %v1309, %v1531
        %v1596 = vsel %vm1468, %v1398, %v1532
        %v1597 = vsel %vm1469, %v1312, %v1533
        %v1598 = vsel %vm1470, %v1401, %v1534
        %v1599 = vsel %vm1471, %v1314, %v1535
        %v1600 = vsel %vm1472, %v1403, %v1536
        %v1601 = vsel %vm1473, %v1317, %v1537
        %v1602 = vsel %vm1474, %v1406, %v1538
        %v1603 = vsel %vm1475, %v1319, %v1539
        %v1604 = vsel %vm1476, %v1408, %v1540
        %v1605 = vsel %vm1477, %v1322, %v1541
        %v1606 = vsel %vm1478, %v1411, %v1542
        %v1607 = vsel %vm1479, %v1324, %v1543
        %v1608 = vsel %vm1480, %v1413, %v1544
        %v1609 = vsel %vm1481, %v1327, %v1545
        %v1610 = vsel %vm1482, %v1416, %v1546
        %v1611 = vsel %vm1483, %v1329, %v1547
        %v1612 = vsel %vm1484, %v1418, %v1548
        %v1613 = vsel %vm1485, %v1332, %v1549
        %v1614 = vsel %vm1486, %v1421, %v1550
        %v1615 = vsel %vm1487, %v1334, %v1551
        %v1616 = vsel %vm1488, %v1423, %v1552
        %v1617 = vpack.c.bf16 %v1554, %v1553
        %v1618 = vpack.c.bf16 %v1556, %v1555
        %v1619 = vpack.c.bf16 %v1558, %v1557
        %v1620 = vpack.c.bf16 %v1560, %v1559
        %v1621 = vpack.c.bf16 %v1562, %v1561
        %v1622 = vpack.c.bf16 %v1564, %v1563
        %v1623 = vpack.c.bf16 %v1566, %v1565
        %v1624 = vpack.c.bf16 %v1568, %v1567
        %v1625 = vpack.c.bf16 %v1570, %v1569
        %v1626 = vpack.c.bf16 %v1572, %v1571
        %v1627 = vpack.c.bf16 %v1574, %v1573
        %v1628 = vpack.c.bf16 %v1576, %v1575
        %v1629 = vpack.c.bf16 %v1578, %v1577
        %v1630 = vpack.c.bf16 %v1580, %v1579
        %v1631 = vpack.c.bf16 %v1582, %v1581
        %v1632 = vpack.c.bf16 %v1584, %v1583
        %v1633 = vpack.c.bf16 %v1586, %v1585
        %v1634 = vpack.c.bf16 %v1588, %v1587
        %v1635 = vpack.c.bf16 %v1590, %v1589
        %v1636 = vpack.c.bf16 %v1592, %v1591
        %v1637 = vpack.c.bf16 %v1594, %v1593
        %v1638 = vpack.c.bf16 %v1596, %v1595
        %v1639 = vpack.c.bf16 %v1598, %v1597
        %v1640 = vpack.c.bf16 %v1600, %v1599
        %v1641 = vpack.c.bf16 %v1602, %v1601
        %v1642 = vpack.c.bf16 %v1604, %v1603
        %v1643 = vpack.c.bf16 %v1606, %v1605
        %v1644 = vpack.c.bf16 %v1608, %v1607
        %v1645 = vpack.c.bf16 %v1610, %v1609
        %v1646 = vpack.c.bf16 %v1612, %v1611
        %v1647 = vpack.c.bf16 %v1614, %v1613
        %v1648 = vpack.c.bf16 %v1616, %v1615
        %1649 = vst [vmem:[%s166] sm:$0xff] %v1617
        %1650 = vst [vmem:[%s166 + $0x8] sm:$0xff] %v1618
        %1651 = vst [vmem:[%s166 + $0x10] sm:$0xff] %v1619
        %1652 = vst [vmem:[%s166 + $0x18] sm:$0xff] %v1620
        %1653 = vst [vmem:[%s166 + $0x20] sm:$0xff] %v1621
        %1654 = vst [vmem:[%s166 + $0x28] sm:$0xff] %v1622
        %1655 = vst [vmem:[%s166 + $0x30] sm:$0xff] %v1623
        %1656 = vst [vmem:[%s166 + $0x38] sm:$0xff] %v1624
        %1657 = vst [vmem:[%s166 + $0x40] sm:$0xff] %v1625
        %1658 = vst [vmem:[%s166 + $0x48] sm:$0xff] %v1626
        %1659 = vst [vmem:[%s166 + $0x50] sm:$0xff] %v1627
        %1660 = vst [vmem:[%s166 + $0x58] sm:$0xff] %v1628
        %1661 = vst [vmem:[%s166 + $0x60] sm:$0xff] %v1629
        %1662 = vst [vmem:[%s166 + $0x68] sm:$0xff] %v1630
        %1663 = vst [vmem:[%s166 + $0x70] sm:$0xff] %v1631
        %1664 = vst [vmem:[%s166 + $0x78] sm:$0xff] %v1632
        %1665 = vst [vmem:[%s166 + $0x80] sm:$0xff] %v1633
        %1666 = vst [vmem:[%s166 + $0x88] sm:$0xff] %v1634
        %1667 = vst [vmem:[%s166 + $0x90] sm:$0xff] %v1635
        %1668 = vst [vmem:[%s166 + $0x98] sm:$0xff] %v1636
        %1669 = vst [vmem:[%s166 + $0xa0] sm:$0xff] %v1637
        %1670 = vst [vmem:[%s166 + $0xa8] sm:$0xff] %v1638
        %1671 = vst [vmem:[%s166 + $0xb0] sm:$0xff] %v1639
        %1672 = vst [vmem:[%s166 + $0xb8] sm:$0xff] %v1640
        %1673 = vst [vmem:[%s166 + $0xc0] sm:$0xff] %v1641
        %1674 = vst [vmem:[%s166 + $0xc8] sm:$0xff] %v1642
        %1675 = vst [vmem:[%s166 + $0xd0] sm:$0xff] %v1643
        %1676 = vst [vmem:[%s166 + $0xd8] sm:$0xff] %v1644
        %1677 = vst [vmem:[%s166 + $0xe0] sm:$0xff] %v1645
        %1678 = vst [vmem:[%s166 + $0xe8] sm:$0xff] %v1646
        %1679 = vst [vmem:[%s166 + $0xf0] sm:$0xff] %v1647
        %1680 = vst [vmem:[%s166 + $0xf8] sm:$0xff] %v1648
        %s1681 = sand.u32 %s93, 1
        %s1682 = scalar_lea.sflag [#allocation3], %s1681
        %s1683 = sand.u32 %s93, 1
        %s1684 = smul.addr %s1683, 256
        %s1685 = scalar_lea.vmem [#allocation2], %s1684
        // Predicated region
        $region33: #{tpu_custom_call.1} parent=31 // pred_check
          %p1686 = pneg %p103
        $region34: #{tpu_custom_call.1} parent=31 // pred_check_branch
          %1688 = sbr.rel (%p1686) target = $region36
        $region35: #{tpu_custom_call.1} parent=31 // pred_region
          %s1689 = smul.u32 4, %s17
          %1691 = vsyncadd %s1682, 0
          %s1692 = smul.addr %s1689, 16
          %s1693 = smul.addr %s1692, 4
          %s1694 = scalar_lea.hbm %s3, %s1693
          %s1695 = sshll.u32 %s1685, 4
          %s1696 = int_to_ptr.vmem [resolvable:$true] %s1695
          %s1697 = sshll.u32 %s1694, 4
          %s1698 = int_to_ptr.hbm [resolvable:$true] %s1697
          %1703 = dma.vmem_to_hbm [thread:$0]  %s1696, 4096, %s1698, %s1682, 128, 128, 8
        $region36: #{tpu_custom_call.1} parent=31 // pred_fallthru
          _
      $region32: #{tpu_custom_call.1} parent=5 // pred_fallthru
        _
      %p1704 = scmp.le.s32.totalorder 2, %s12
      // Predicated region
      $region37: #{tpu_custom_call.1} parent=5 // pred_check
        %p1705 = pneg %p1704
      $region38: #{tpu_custom_call.1} parent=5 // pred_check_branch
        %1707 = sbr.rel (%p1705) target = $region40
      $region39: #{tpu_custom_call.1} parent=5 // pred_region
        %s1708 = ssub.s32 %s12, 2
        // Predicated region
        $region41: #{tpu_custom_call.1} parent=39 // pred_check
          %p1709 = pneg %p109
        $region42: #{tpu_custom_call.1} parent=39 // pred_check_branch
          %1711 = sbr.rel (%p1709) target = $region44
        $region43: #{tpu_custom_call.1} parent=39 // pred_region
          %s1712 = sand.u32 %s94, 1
          %s1713 = scalar_lea.sflag [#allocation3], %s1712
          %s1714 = sand.u32 %s94, 1
          %s1715 = smul.addr %s1714, 256
          %s1716 = scalar_lea.vmem [#allocation2], %s1715
          %1718 = dma.done %s1713, 4096
        $region44: #{tpu_custom_call.1} parent=39 // pred_fallthru
          _
      $region40: #{tpu_custom_call.1} parent=5 // pred_fallthru
        _
    $region6: #{tpu_custom_call.1} parent=1 // loop_footer
      %s16 = sadd.s32 1, %s12
    $region7: #{tpu_custom_call.1} parent=1 // loop_footer_branch
      %11 = sbr.rel target = $region3
    $region8: #{tpu_custom_call.1} parent=1 // loop_exit
      _
    %1719 = vsyncpa [#allocation3], 1
    %s1720 = scalar_lea.sflag [#allocation3], 1
    %1721 = vsyncpa %s1720, 1

</llo_original>
